<compile_context>
chip_gen: v7x
topology: tpu7x:2x2x1
jax: 0.10.0
libtpu: 0.0.40
codegen_flags: <defaults>
</compile_context>

<pallas_src>
import jax
import jax.numpy as jnp
from jax.experimental import pallas as pl
from jax.experimental.pallas import tpu as pltpu


def satt_kernel(seq_ref, w1_ref, w2_ref, w_ref, b_ref, v_ref, out_ref):
    # seq_ref : (BB, C, N, T)   one block of BB batch elements
    # w1_ref  : (C, 1)          conv1 weight (1x1 conv over channels)
    # w2_ref  : (1, T)          conv2 weight (1x1 conv over time after permute)
    # w_ref   : (T, C), b_ref/v_ref : (N, N), out_ref : (BB, N, N)
    BB, C, N, T = seq_ref.shape

    seq = seq_ref[...].astype(jnp.float32)              # (BB, C, N, T)
    w1 = w1_ref[...].astype(jnp.float32)                # (C, 1)
    w2 = w2_ref[...].astype(jnp.float32)                # (1, T)
    w = w_ref[...].astype(jnp.float32)                  # (T, C)
    b = b_ref[...].astype(jnp.float32)                  # (N, N)
    v = v_ref[...].astype(jnp.float32)                  # (N, N)

    # conv1 (1x1 over channels): f1[b, n, t] = sum_c w1[c] * seq[b, c, n, t]
    f1 = jnp.sum(seq * w1[None, :, :, None], axis=1)    # (BB, N, T)
    # conv2 (1x1 over time after permute): f2[b, c, n] = sum_t w2[t] * seq[b, c, n, t]
    f2 = jnp.sum(seq * w2[None, None, :, :], axis=3)    # (BB, C, N)

    # f1 @ w folded across the batch block: one MXU matmul, M = BB*N, K = T.
    if N % 8 == 0:
        s = jnp.dot(f1.reshape(BB * N, T), w,
                    preferred_element_type=jnp.float32).reshape(BB, N, C)
    else:  # safe fallback if num_nodes is not sublane-aligned
        s = jnp.einsum("bnt,btc->bnc", f1,
                       jnp.broadcast_to(w[None], (BB, T, C)),
                       preferred_element_type=jnp.float32)

    # batched (s @ f2) + b, then sigmoid via exp + EUP reciprocal
    logits = jnp.einsum("bnc,bcm->bnm", s, f2,
                        preferred_element_type=jnp.float32) + b
    logits = pl.reciprocal(1.0 + jnp.exp(-logits), approx=False)   # sigmoid

    # v @ logits, batched (v is batch-invariant, broadcast across the block)
    vb = jnp.broadcast_to(v[None, :, :], (BB, N, N))
    logits = jnp.einsum("bnk,bkm->bnm", vb, logits,
                        preferred_element_type=jnp.float32)        # (BB, N, N)

    # a, _ = torch.max(logits, 1, True); logits = logits - a   (per-batch column max)
    a = jnp.max(logits, axis=1, keepdims=True)                     # (BB, 1, N)
    logits = logits - a

    # row softmax over the last dim, numerically stabilized; divide via reciprocal
    m = jnp.max(logits, axis=2, keepdims=True)
    e = jnp.exp(logits - m)
    inv = pl.reciprocal(jnp.sum(e, axis=2, keepdims=True), approx=False)
    out_ref[...] = (e * inv).astype(out_ref.dtype)


def _choose_block_b(B, C, N, T, vmem_budget_bytes=8 << 20):
    """Pick the per-grid-step batch block BB.

    - Large enough to amortize the ~0.35 us per-grid-step overhead.
    - Small enough that the double-buffered seq/out blocks plus the main f32
      intermediates fit a VMEM budget that is safe on every generation
      (v7x: 64 MiB physical / 32 MiB scoped default; v5e/v6e: 128 MiB).
    - Keeps >= 2 grid steps when B >= 2 so both v7x TensorCores get work.
    """
    per_batch_bytes = 4 * (C * N * T          # seq block
                           + 3 * N * N        # logits / exp / out
                           + N * T + C * N)   # f1, f2
    cap = max(1, vmem_budget_bytes // (2 * per_batch_bytes))  # x2: double buffering
    target = int(min(cap, max(1, B // 2)))
    bb = 1
    for d in range(1, min(B, target) + 1):
        if B % d == 0:
            bb = d
    return bb


def satt_forward(seq, w1, w2, w, b, v, *, block_b=None):
    B, C, N, T = seq.shape
    if block_b is None:
        block_b = _choose_block_b(B, C, N, T)
    assert B % block_b == 0, "block_b must divide the batch size"
    num_blocks = B // block_b

    return pl.pallas_call(
        satt_kernel,
        out_shape=jax.ShapeDtypeStruct((B, N, N), jnp.float32),
        grid=(num_blocks,),
        in_specs=[
            pl.BlockSpec((block_b, C, N, T), lambda i: (i, 0, 0, 0)),  # seq block
            pl.BlockSpec((C, 1), lambda i: (0, 0)),                    # conv1 weight
            pl.BlockSpec((1, T), lambda i: (0, 0)),                    # conv2 weight
            pl.BlockSpec((T, C), lambda i: (0, 0)),                    # w
            pl.BlockSpec((N, N), lambda i: (0, 0)),                    # b
            pl.BlockSpec((N, N), lambda i: (0, 0)),                    # v
        ],
        out_specs=pl.BlockSpec((block_b, N, N), lambda i: (i, 0, 0)),
        compiler_params=pltpu.CompilerParams(
            dimension_semantics=("parallel",)),
    )(seq, w1, w2, w, b, v)


def satt_reference(seq, w1, w2, w, b, v):
    # Pure-JAX reference mirroring the PyTorch forward (f32-accurate matmuls).
    hp = jax.lax.Precision.HIGHEST
    f1 = jnp.einsum("c,bcnt->bnt", w1[:, 0], seq, precision=hp)      # conv1 + squeeze
    f2 = jnp.einsum("t,bcnt->bcn", w2[0], seq, precision=hp)         # permute + conv2 + squeeze
    logits = jax.nn.sigmoid(
        jnp.einsum("bnt,tc,bcm->bnm", f1, w, f2, precision=hp) + b)
    logits = jnp.einsum("nm,bmk->bnk", v, logits, precision=hp)
    a = jnp.max(logits, axis=1, keepdims=True)
    return jax.nn.softmax(logits - a, axis=-1)


def init_params(key, c_in, num_nodes, tem_size):
    k1, k2, k3, k4 = jax.random.split(key, 4)
    # conv 1x1 weights (deterministic uniform init)
    w1 = jax.random.uniform(k1, (c_in, 1), jnp.float32, -1.0, 1.0) / jnp.sqrt(c_in)
    w2 = jax.random.uniform(k2, (1, tem_size), jnp.float32, -1.0, 1.0) / jnp.sqrt(tem_size)
    # xavier_uniform for w and v, zeros for b (as in the module)
    lim_w = (6.0 / (tem_size + c_in)) ** 0.5
    w = jax.random.uniform(k3, (tem_size, c_in), jnp.float32, -lim_w, lim_w)
    b = jnp.zeros((num_nodes, num_nodes), jnp.float32)
    lim_v = (6.0 / (2 * num_nodes)) ** 0.5
    v = jax.random.uniform(k4, (num_nodes, num_nodes), jnp.float32, -lim_v, lim_v)
    return w1, w2, w, b, v


if __name__ == "__main__":
    # Small shapes consistent with the module; B=8 exercises the batched path
    # (block_b=4 -> grid=(2,), i.e. >=2 parallel steps for v7x megacore).
    B, c_in, num_nodes, tem_size = 8, 4, 16, 16

    key = jax.random.PRNGKey(0)
    k_seq, k_par = jax.random.split(key)
    seq = jax.random.normal(k_seq, (B, c_in, num_nodes, tem_size), jnp.float32)
    w1, w2, w, b, v = init_params(k_par, c_in, num_nodes, tem_size)

    out = jax.block_until_ready(satt_forward(seq, w1, w2, w, b, v))

    ref = satt_reference(seq, w1, w2, w, b, v)
    assert out.shape == (B, num_nodes, num_nodes)
    assert jnp.allclose(out, ref, atol=1e-5, rtol=1e-5), "mismatch vs reference"

    print("KERNEL_OK")
</pallas_src>

<mosaic_0001>
module attributes {stable_mosaic.version = 11 : i64} {
  func.func @satt_kernel(%arg0: i32, %arg1: memref<4x4x16x16xf32, #tpu.memory_space<vmem>>, %arg2: memref<4x1xf32, #tpu.memory_space<vmem>>, %arg3: memref<1x16xf32, #tpu.memory_space<vmem>>, %arg4: memref<16x4xf32, #tpu.memory_space<vmem>>, %arg5: memref<16x16xf32, #tpu.memory_space<vmem>>, %arg6: memref<16x16xf32, #tpu.memory_space<vmem>>, %arg7: memref<4x16x16xf32, #tpu.memory_space<vmem>>) attributes {dimension_semantics = [#tpu.dimension_semantics<parallel>], iteration_bounds = array<i64: 2>, scalar_prefetch = 0 : i64, scratch_operands = 0 : i64, tpu.core_type = #tpu.core_type<tc>, window_params = [{transform_indices = @transform_0, window_bounds = array<i64: 4, 4, 16, 16>}, {pipeline_mode = #tpu.pipeline_mode<synchronous>, transform_indices = @transform_1, window_bounds = array<i64: 4, 1>}, {pipeline_mode = #tpu.pipeline_mode<synchronous>, transform_indices = @transform_2, window_bounds = array<i64: 1, 16>}, {pipeline_mode = #tpu.pipeline_mode<synchronous>, transform_indices = @transform_3, window_bounds = array<i64: 16, 4>}, {pipeline_mode = #tpu.pipeline_mode<synchronous>, transform_indices = @transform_4, window_bounds = array<i64: 16, 16>}, {pipeline_mode = #tpu.pipeline_mode<synchronous>, transform_indices = @transform_5, window_bounds = array<i64: 16, 16>}, {transform_indices = @transform_6, window_bounds = array<i64: 4, 16, 16>}]} {
    %c0 = arith.constant 0 : index
    %c0_0 = arith.constant 0 : index
    %c0_1 = arith.constant 0 : index
    %c0_2 = arith.constant 0 : index
    %0 = vector.load %arg1[%c0, %c0_0, %c0_1, %c0_2] : memref<4x4x16x16xf32, #tpu.memory_space<vmem>>, vector<4x4x16x16xf32>
    %c0_3 = arith.constant 0 : index
    %c0_4 = arith.constant 0 : index
    %1 = vector.load %arg2[%c0_3, %c0_4] : memref<4x1xf32, #tpu.memory_space<vmem>>, vector<4x1xf32>
    %c0_5 = arith.constant 0 : index
    %c0_6 = arith.constant 0 : index
    %2 = vector.load %arg3[%c0_5, %c0_6] : memref<1x16xf32, #tpu.memory_space<vmem>>, vector<1x16xf32>
    %c0_7 = arith.constant 0 : index
    %c0_8 = arith.constant 0 : index
    %3 = vector.load %arg4[%c0_7, %c0_8] : memref<16x4xf32, #tpu.memory_space<vmem>>, vector<16x4xf32>
    %c0_9 = arith.constant 0 : index
    %c0_10 = arith.constant 0 : index
    %4 = vector.load %arg5[%c0_9, %c0_10] : memref<16x16xf32, #tpu.memory_space<vmem>>, vector<16x16xf32>
    %c0_11 = arith.constant 0 : index
    %c0_12 = arith.constant 0 : index
    %5 = vector.load %arg6[%c0_11, %c0_12] : memref<16x16xf32, #tpu.memory_space<vmem>>, vector<16x16xf32>
    %6 = vector.shape_cast %1 : vector<4x1xf32> to vector<1x4x1x1xf32>
    %7 = vector.broadcast %6 : vector<1x4x1x1xf32> to vector<4x4x16x16xf32>
    %8 = arith.mulf %0, %7 : vector<4x4x16x16xf32>
    %cst = arith.constant dense<0.000000e+00> : vector<4x16x16xf32>
    %9 = vector.multi_reduction <add>, %8, %cst [1] : vector<4x4x16x16xf32> to vector<4x16x16xf32>
    %10 = vector.shape_cast %2 : vector<1x16xf32> to vector<1x1x1x16xf32>
    %11 = vector.broadcast %10 : vector<1x1x1x16xf32> to vector<4x4x16x16xf32>
    %12 = arith.mulf %0, %11 : vector<4x4x16x16xf32>
    %cst_13 = arith.constant dense<0.000000e+00> : vector<4x4x16xf32>
    %13 = vector.multi_reduction <add>, %12, %cst_13 [3] : vector<4x4x16x16xf32> to vector<4x4x16xf32>
    %14 = vector.shape_cast %9 : vector<4x16x16xf32> to vector<64x16xf32>
    %cst_14 = arith.constant dense<0.000000e+00> : vector<64x4xf32>
    %15 = tpu.matmul %14, %3, %cst_14 {dimension_numbers = #tpu.dot_dimension_numbers<[1], [0], [0], [1], [0, 0, 1, 1], [], []>} : vector<64x16xf32>, vector<16x4xf32>, vector<64x4xf32> -> vector<64x4xf32>
    %16 = vector.shape_cast %15 : vector<64x4xf32> to vector<4x16x4xf32>
    "tpu.trace_start"() <{level = 10 : i32, message = "bnc,bcm->bnm"}> : () -> ()
    %cst_15 = arith.constant dense<0.000000e+00> : vector<4x16x16xf32>
    %17 = tpu.matmul %16, %13, %cst_15 {dimension_numbers = #tpu.dot_dimension_numbers<[2], [1], [1], [2], [0, 0, 0, 1, 1, 2], [0], [0]>} : vector<4x16x4xf32>, vector<4x4x16xf32>, vector<4x16x16xf32> -> vector<4x16x16xf32>
    "tpu.trace_stop"() : () -> ()
    %18 = vector.shape_cast %4 : vector<16x16xf32> to vector<1x16x16xf32>
    %19 = vector.broadcast %18 : vector<1x16x16xf32> to vector<4x16x16xf32>
    %20 = arith.addf %17, %19 : vector<4x16x16xf32>
    %cst_16 = arith.constant 0.000000e+00 : f32
    %21 = vector.broadcast %cst_16 : f32 to vector<4x16x16xf32>
    %22 = arith.subf %21, %20 : vector<4x16x16xf32>
    %23 = math.exp %22 : vector<4x16x16xf32>
    %cst_17 = arith.constant 1.000000e+00 : f32
    %24 = vector.broadcast %cst_17 : f32 to vector<4x16x16xf32>
    %25 = arith.addf %24, %23 : vector<4x16x16xf32>
    %26 = tpu.reciprocal %25 : vector<4x16x16xf32> -> vector<4x16x16xf32>
    %27 = vector.shape_cast %5 : vector<16x16xf32> to vector<1x16x16xf32>
    %28 = vector.shape_cast %27 : vector<1x16x16xf32> to vector<1x16x16xf32>
    %29 = vector.broadcast %28 : vector<1x16x16xf32> to vector<4x16x16xf32>
    "tpu.trace_start"() <{level = 10 : i32, message = "bnk,bkm->bnm"}> : () -> ()
    %cst_18 = arith.constant dense<0.000000e+00> : vector<4x16x16xf32>
    %30 = tpu.matmul %29, %26, %cst_18 {dimension_numbers = #tpu.dot_dimension_numbers<[2], [1], [1], [2], [0, 0, 0, 1, 1, 2], [0], [0]>} : vector<4x16x16xf32>, vector<4x16x16xf32>, vector<4x16x16xf32> -> vector<4x16x16xf32>
    "tpu.trace_stop"() : () -> ()
    %cst_19 = arith.constant dense<0xFF800000> : vector<4x16xf32>
    %31 = vector.multi_reduction <maximumf>, %30, %cst_19 [1] : vector<4x16x16xf32> to vector<4x16xf32>
    %32 = vector.shape_cast %31 : vector<4x16xf32> to vector<4x1x16xf32>
    %33 = vector.broadcast %32 : vector<4x1x16xf32> to vector<4x16x16xf32>
    %34 = arith.subf %30, %33 : vector<4x16x16xf32>
    %cst_20 = arith.constant dense<0xFF800000> : vector<4x16xf32>
    %35 = vector.multi_reduction <maximumf>, %34, %cst_20 [2] : vector<4x16x16xf32> to vector<4x16xf32>
    %36 = vector.shape_cast %35 : vector<4x16xf32> to vector<4x16x1xf32>
    %37 = vector.broadcast %36 : vector<4x16x1xf32> to vector<4x16x16xf32>
    %38 = arith.subf %34, %37 : vector<4x16x16xf32>
    %39 = math.exp %38 : vector<4x16x16xf32>
    %cst_21 = arith.constant dense<0.000000e+00> : vector<4x16xf32>
    %40 = vector.multi_reduction <add>, %39, %cst_21 [2] : vector<4x16x16xf32> to vector<4x16xf32>
    %41 = vector.shape_cast %40 : vector<4x16xf32> to vector<4x16x1xf32>
    %42 = tpu.reciprocal %41 : vector<4x16x1xf32> -> vector<4x16x1xf32>
    %43 = vector.broadcast %42 : vector<4x16x1xf32> to vector<4x16x16xf32>
    %44 = arith.mulf %39, %43 : vector<4x16x16xf32>
    %c0_22 = arith.constant 0 : index
    %c0_23 = arith.constant 0 : index
    %c0_24 = arith.constant 0 : index
    %45 = vector.load %arg7[%c0_22, %c0_23, %c0_24] : memref<4x16x16xf32, #tpu.memory_space<vmem>>, vector<4x16x16xf32>
    tpu.vector_store %arg7[%c0_22, %c0_23, %c0_24], %44 {strides = array<i32>} : memref<4x16x16xf32, #tpu.memory_space<vmem>>, vector<4x16x16xf32>,
    return
  }
  func.func @transform_0(%arg0: i32) -> (i32, i32, i32, i32) {
    %c0_i32 = arith.constant 0 : i32
    %c0_i32_0 = arith.constant 0 : i32
    %c0_i32_1 = arith.constant 0 : i32
    %c0_i32_2 = arith.constant 0 : i32
    return %arg0, %c0_i32, %c0_i32_0, %c0_i32_1 : i32, i32, i32, i32
  }
  func.func @transform_1(%arg0: i32) -> (i32, i32) {
    %c0_i32 = arith.constant 0 : i32
    %c0_i32_0 = arith.constant 0 : i32
    %c0_i32_1 = arith.constant 0 : i32
    return %c0_i32, %c0_i32_0 : i32, i32
  }
  func.func @transform_2(%arg0: i32) -> (i32, i32) {
    %c0_i32 = arith.constant 0 : i32
    %c0_i32_0 = arith.constant 0 : i32
    %c0_i32_1 = arith.constant 0 : i32
    return %c0_i32, %c0_i32_0 : i32, i32
  }
  func.func @transform_3(%arg0: i32) -> (i32, i32) {
    %c0_i32 = arith.constant 0 : i32
    %c0_i32_0 = arith.constant 0 : i32
    %c0_i32_1 = arith.constant 0 : i32
    return %c0_i32, %c0_i32_0 : i32, i32
  }
  func.func @transform_4(%arg0: i32) -> (i32, i32) {
    %c0_i32 = arith.constant 0 : i32
    %c0_i32_0 = arith.constant 0 : i32
    %c0_i32_1 = arith.constant 0 : i32
    return %c0_i32, %c0_i32_0 : i32, i32
  }
  func.func @transform_5(%arg0: i32) -> (i32, i32) {
    %c0_i32 = arith.constant 0 : i32
    %c0_i32_0 = arith.constant 0 : i32
    %c0_i32_1 = arith.constant 0 : i32
    return %c0_i32, %c0_i32_0 : i32, i32
  }
  func.func @transform_6(%arg0: i32) -> (i32, i32, i32) {
    %c0_i32 = arith.constant 0 : i32
    %c0_i32_0 = arith.constant 0 : i32
    %c0_i32_1 = arith.constant 0 : i32
    return %arg0, %c0_i32, %c0_i32_0 : i32, i32, i32
  }
}

</mosaic_0001>

<llo_original>
// kernel: tpu_custom_call.1
$region0: #{tpu_custom_call.1}
  #allocation0 [shape = 'u32[]', space=smem, size = 0x4, offset = 0x4, fixed_abs, tag = 'smem constant byte address 0x4 - core index']
  #allocation1 [shape = 'u32[144,128]{1,0:T(1,128)}', space=vmem, size = 0x12000, scoped, tag = 'internal scratch']
  %s0 = inlined_call_operand.hbm [shape: f32[8,4,16,16], index: 0, kind: input, shape index: {}]
  %s1 = inlined_call_operand.vmem [shape: f32[4,1], index: 1, kind: input, shape index: {}]
  %s2 = inlined_call_operand.hbm [shape: f32[1,16], index: 2, kind: input, shape index: {}]
  %s3 = inlined_call_operand.vmem [shape: f32[16,4], index: 3, kind: input, shape index: {}]
  %s4 = inlined_call_operand.vmem [shape: f32[16,16], index: 4, kind: input, shape index: {}]
  %s5 = inlined_call_operand.vmem [shape: f32[16,16], index: 5, kind: input, shape index: {}]
  %s6 = inlined_call_operand.hbm [shape: f32[8,16,16], index: 6, kind: output, shape index: {}]
  %s7 = sld [smem:[#allocation0]]
  $region65: #{tpu_custom_call.1} parent=0
    _
  %s9 = ssub.s32 1, %s7
  %s10 = scalar_select 0, %s9, %s7
  $region1: #{tpu_custom_call.1} parent=0
    #allocation2 [shape = 'u8[262144]{0}', space=vmem, size = 0x40000, scoped, tag = 'input window, operand 0']
    #allocation3 [shape = 's32[2]{0}', space=sflag, size = 0x8, scoped, tag = 'scoped memory for tpu_custom_call.1']
    #allocation4 [shape = 's32[2]{0}', space=sflag, size = 0x8, scoped, tag = 'scoped memory for tpu_custom_call.1']
    #allocation5 [shape = 'u8[512]{0}', space=vmem, size = 0x400, scoped, tag = 'input window, operand 2, single buffered']
    #allocation6 [shape = 's32[1]{0}', space=sflag, size = 0x4, scoped, tag = 'scoped memory for tpu_custom_call.1']
    #allocation7 [shape = 'u8[65536]{0}', space=vmem, size = 0x10000, scoped, tag = 'output window, operand 0']
    %11 = vsyncpa [#allocation3], 0
    %s12 = scalar_lea.sflag [#allocation3], 1
    %13 = vsyncpa %s12, 0
    %14 = vsyncpa [#allocation6], 0
    %15 = vsyncpa [#allocation4], 0
    %s16 = scalar_lea.sflag [#allocation4], 1
    %17 = vsyncpa %s16, 0
    loop: start=0, step=1, limit=4
    $region2: #{tpu_custom_call.1} parent=1 // loop_pre_header
      _
    $region3: #{tpu_custom_call.1} parent=1 // loop_header
      %s19 = sphi 0, %s23
      %p20 = scmp.ge.s32.totalorder %s19, 4
      %s29 = sphi 0, %s31
      %s32 = sphi 0, %s29
      %s33 = sphi 0, %s32
      %s49 = sphi 0, %s33
      %s53 = sphi 0, %s53
      %s55 = sphi 0, %s53
      %s56 = sphi 0, %s55
      %s70 = sphi 0, %s56
      %s74 = sphi 0, %s74
      %s76 = sphi 0, %s74
      %s77 = sphi 0, %s76
      %s91 = sphi 0, %s77
      %s95 = sphi 0, %s95
      %s97 = sphi 0, %s95
      %s98 = sphi 0, %s97
      %s112 = sphi 0, %s98
      %s116 = sphi 0, %s116
      %s118 = sphi 0, %s116
      %s119 = sphi 0, %s118
      %s133 = sphi 0, %s119
      %s137 = sphi 0, %s137
      %s139 = sphi 0, %s137
      %s140 = sphi 0, %s139
      %s154 = sphi 0, %s140
      %s160 = sphi 0, %s162
      %s163 = sphi 0, %s160
      %s164 = sphi 0, %s163
      %s180 = sphi 0, %s164
    $region4: #{tpu_custom_call.1} parent=1 // loop_header_branch
      %22 = sbr.rel (%p20) target = $region8
    $region5: #{tpu_custom_call.1} parent=1 // loop_body
      %s24 = ssub.s32 %s19, 1
      %s25 = ssub.s32 %s19, 2
      %s26 = sadd.s32 %s19, 1
      %s27 = ssub.s32 %s19, %s26
      %p28 = scmp.eq.s32.totalorder %s27, 0
      %s30 = sadd.s32 %s29, 1
      %s31 = scalar_select %p28, %s29, %s30
      %p34 = pneg %p28
      %p35 = scmp.eq.s32.totalorder %s19, 1
      %p36 = por %p34, %p35
      %p37 = scmp.ne.s32.totalorder %s29, %s32
      %p38 = scmp.eq.s32.totalorder %s19, 0
      %p39 = por %p37, %p38
      %p40 = scmp.ne.s32.totalorder %s29, %s32
      %p41 = scmp.eq.s32.totalorder %s24, 1
      %p42 = por %p40, %p41
      %p43 = scmp.ne.s32.totalorder %s32, %s33
      %p44 = scmp.eq.s32.totalorder %s24, 0
      %p45 = por %p43, %p44
      %p46 = scmp.ne.s32.totalorder %s32, %s33
      %p47 = scmp.eq.s32.totalorder %s25, 1
      %p48 = por %p46, %p47
      %p50 = scmp.ne.s32.totalorder %s33, %s49
      %p51 = scmp.eq.s32.totalorder %s25, 0
      %p52 = por %p50, %p51
      %s54 = sadd.s32 %s53, 1
      %p57 = scmp.eq.s32.totalorder %s19, 1
      %p58 = scmp.ne.s32.totalorder %s53, %s55
      %p59 = scmp.eq.s32.totalorder %s19, 0
      %p60 = por %p58, %p59
      %p61 = scmp.ne.s32.totalorder %s53, %s55
      %p62 = scmp.eq.s32.totalorder %s24, 1
      %p63 = por %p61, %p62
      %p64 = scmp.ne.s32.totalorder %s55, %s56
      %p65 = scmp.eq.s32.totalorder %s24, 0
      %p66 = por %p64, %p65
      %p67 = scmp.ne.s32.totalorder %s55, %s56
      %p68 = scmp.eq.s32.totalorder %s25, 1
      %p69 = por %p67, %p68
      %p71 = scmp.ne.s32.totalorder %s56, %s70
      %p72 = scmp.eq.s32.totalorder %s25, 0
      %p73 = por %p71, %p72
      %s75 = sadd.s32 %s74, 1
      %p78 = scmp.eq.s32.totalorder %s19, 1
      %p79 = scmp.ne.s32.totalorder %s74, %s76
      %p80 = scmp.eq.s32.totalorder %s19, 0
      %p81 = por %p79, %p80
      %p82 = scmp.ne.s32.totalorder %s74, %s76
      %p83 = scmp.eq.s32.totalorder %s24, 1
      %p84 = por %p82, %p83
      %p85 = scmp.ne.s32.totalorder %s76, %s77
      %p86 = scmp.eq.s32.totalorder %s24, 0
      %p87 = por %p85, %p86
      %p88 = scmp.ne.s32.totalorder %s76, %s77
      %p89 = scmp.eq.s32.totalorder %s25, 1
      %p90 = por %p88, %p89
      %p92 = scmp.ne.s32.totalorder %s77, %s91
      %p93 = scmp.eq.s32.totalorder %s25, 0
      %p94 = por %p92, %p93
      %s96 = sadd.s32 %s95, 1
      %p99 = scmp.eq.s32.totalorder %s19, 1
      %p100 = scmp.ne.s32.totalorder %s95, %s97
      %p101 = scmp.eq.s32.totalorder %s19, 0
      %p102 = por %p100, %p101
      %p103 = scmp.ne.s32.totalorder %s95, %s97
      %p104 = scmp.eq.s32.totalorder %s24, 1
      %p105 = por %p103, %p104
      %p106 = scmp.ne.s32.totalorder %s97, %s98
      %p107 = scmp.eq.s32.totalorder %s24, 0
      %p108 = por %p106, %p107
      %p109 = scmp.ne.s32.totalorder %s97, %s98
      %p110 = scmp.eq.s32.totalorder %s25, 1
      %p111 = por %p109, %p110
      %p113 = scmp.ne.s32.totalorder %s98, %s112
      %p114 = scmp.eq.s32.totalorder %s25, 0
      %p115 = por %p113, %p114
      %s117 = sadd.s32 %s116, 1
      %p120 = scmp.eq.s32.totalorder %s19, 1
      %p121 = scmp.ne.s32.totalorder %s116, %s118
      %p122 = scmp.eq.s32.totalorder %s19, 0
      %p123 = por %p121, %p122
      %p124 = scmp.ne.s32.totalorder %s116, %s118
      %p125 = scmp.eq.s32.totalorder %s24, 1
      %p126 = por %p124, %p125
      %p127 = scmp.ne.s32.totalorder %s118, %s119
      %p128 = scmp.eq.s32.totalorder %s24, 0
      %p129 = por %p127, %p128
      %p130 = scmp.ne.s32.totalorder %s118, %s119
      %p131 = scmp.eq.s32.totalorder %s25, 1
      %p132 = por %p130, %p131
      %p134 = scmp.ne.s32.totalorder %s119, %s133
      %p135 = scmp.eq.s32.totalorder %s25, 0
      %p136 = por %p134, %p135
      %s138 = sadd.s32 %s137, 1
      %p141 = scmp.eq.s32.totalorder %s19, 1
      %p142 = scmp.ne.s32.totalorder %s137, %s139
      %p143 = scmp.eq.s32.totalorder %s19, 0
      %p144 = por %p142, %p143
      %p145 = scmp.ne.s32.totalorder %s137, %s139
      %p146 = scmp.eq.s32.totalorder %s24, 1
      %p147 = por %p145, %p146
      %p148 = scmp.ne.s32.totalorder %s139, %s140
      %p149 = scmp.eq.s32.totalorder %s24, 0
      %p150 = por %p148, %p149
      %p151 = scmp.ne.s32.totalorder %s139, %s140
      %p152 = scmp.eq.s32.totalorder %s25, 1
      %p153 = por %p151, %p152
      %p155 = scmp.ne.s32.totalorder %s140, %s154
      %p156 = scmp.eq.s32.totalorder %s25, 0
      %p157 = por %p155, %p156
      %s158 = ssub.s32 %s19, %s26
      %p159 = scmp.eq.s32.totalorder %s158, 0
      %s161 = sadd.s32 %s160, 1
      %s162 = scalar_select %p159, %s160, %s161
      %p165 = pneg %p159
      %p166 = scmp.eq.s32.totalorder %s19, 1
      %p167 = por %p165, %p166
      %p168 = scmp.ne.s32.totalorder %s160, %s163
      %p169 = scmp.eq.s32.totalorder %s19, 0
      %p170 = por %p168, %p169
      %p171 = scmp.ne.s32.totalorder %s160, %s163
      %p172 = scmp.eq.s32.totalorder %s24, 1
      %p173 = por %p171, %p172
      %p174 = scmp.ne.s32.totalorder %s163, %s164
      %p175 = scmp.eq.s32.totalorder %s24, 0
      %p176 = por %p174, %p175
      %p177 = scmp.ne.s32.totalorder %s163, %s164
      %p178 = scmp.eq.s32.totalorder %s25, 1
      %p179 = por %p177, %p178
      %p181 = scmp.ne.s32.totalorder %s164, %s180
      %p182 = scmp.eq.s32.totalorder %s25, 0
      %p183 = por %p181, %p182
      %p184 = scmp.le.s32.totalorder 1, %s19
      %p185 = scmp.lt.s32.totalorder %s19, 3
      %p186 = pnand %p184, %p185
      %p187 = pneg %p186
      // Predicated region
      $region9: #{tpu_custom_call.1} parent=5 // pred_check
        _
      $region10: #{tpu_custom_call.1} parent=5 // pred_check_branch
        %189 = sbr.rel (%p186) target = $region12
      $region11: #{tpu_custom_call.1} parent=5 // pred_region
        %s190 = ssub.s32 %s19, 1
        // Predicated region
        $region13: #{tpu_custom_call.1} parent=11 // pred_check
          %p191 = pneg %p66
        $region14: #{tpu_custom_call.1} parent=11 // pred_check_branch
          %193 = sbr.rel (%p191) target = $region16
        $region15: #{tpu_custom_call.1} parent=11 // pred_region
          _
        $region16: #{tpu_custom_call.1} parent=11 // pred_fallthru
          _
        // Predicated region
        $region17: #{tpu_custom_call.1} parent=11 // pred_check
          %p194 = pneg %p87
        $region18: #{tpu_custom_call.1} parent=11 // pred_check_branch
          %196 = sbr.rel (%p194) target = $region20
        $region19: #{tpu_custom_call.1} parent=11 // pred_region
          %s198 = ssub.s32 16, 16
          %199 = vsyncadd [#allocation6], %s198
          %s201 = sshll.u32 [#allocation5], 4
          %s202 = int_to_ptr.vmem [resolvable:$true] %s201
          %204 = dma.hbm_to_vmem [thread:$0]  %s2, 16, %s202, [#allocation6]
        $region20: #{tpu_custom_call.1} parent=11 // pred_fallthru
          _
        // Predicated region
        $region21: #{tpu_custom_call.1} parent=11 // pred_check
          %p205 = pneg %p108
        $region22: #{tpu_custom_call.1} parent=11 // pred_check_branch
          %207 = sbr.rel (%p205) target = $region24
        $region23: #{tpu_custom_call.1} parent=11 // pred_region
          _
        $region24: #{tpu_custom_call.1} parent=11 // pred_fallthru
          _
        // Predicated region
        $region25: #{tpu_custom_call.1} parent=11 // pred_check
          %p208 = pneg %p129
        $region26: #{tpu_custom_call.1} parent=11 // pred_check_branch
          %210 = sbr.rel (%p208) target = $region28
        $region27: #{tpu_custom_call.1} parent=11 // pred_region
          _
        $region28: #{tpu_custom_call.1} parent=11 // pred_fallthru
          _
        // Predicated region
        $region29: #{tpu_custom_call.1} parent=11 // pred_check
          %p211 = pneg %p150
        $region30: #{tpu_custom_call.1} parent=11 // pred_check_branch
          %213 = sbr.rel (%p211) target = $region32
        $region31: #{tpu_custom_call.1} parent=11 // pred_region
          _
        $region32: #{tpu_custom_call.1} parent=11 // pred_fallthru
          _
      $region12: #{tpu_custom_call.1} parent=5 // pred_fallthru
        _
      %p214 = scmp.lt.s32.totalorder %s19, 2
      // Predicated region
      $region33: #{tpu_custom_call.1} parent=5 // pred_check
        %p215 = pneg %p214
      $region34: #{tpu_custom_call.1} parent=5 // pred_check_branch
        %217 = sbr.rel (%p215) target = $region36
      $region35: #{tpu_custom_call.1} parent=5 // pred_region
        // Predicated region
        $region37: #{tpu_custom_call.1} parent=35 // pred_check
          %p218 = pneg %p39
        $region38: #{tpu_custom_call.1} parent=35 // pred_check_branch
          %220 = sbr.rel (%p218) target = $region40
        $region39: #{tpu_custom_call.1} parent=35 // pred_region
          %s221 = sand.u32 %s29, 1
          %s222 = scalar_lea.sflag [#allocation3], %s221
          %s223 = sand.u32 %s29, 1
          %s224 = smul.addr %s223, 256
          %s225 = scalar_lea.vmem [#allocation2], %s224
          %s226 = smul.u32 4, %s19
          %s228 = ssub.s32 4096, 4096
          %229 = vsyncadd %s222, %s228
          %s230 = smul.addr %s226, 8
          %s231 = smul.addr %s230, 128
          %s232 = scalar_lea.hbm %s0, %s231
          %s233 = sshll.u32 %s225, 4
          %s234 = int_to_ptr.vmem [resolvable:$true] %s233
          %239 = dma.hbm_to_vmem [thread:$0]  %s232, 4096, %s234, %s222, 128, 128, 8
        $region40: #{tpu_custom_call.1} parent=35 // pred_fallthru
          _
      $region36: #{tpu_custom_call.1} parent=5 // pred_fallthru
        _
      %p240 = scmp.le.s32.totalorder 1, %s19
      %p241 = scmp.lt.s32.totalorder %s19, 3
      %p242 = pnand %p240, %p241
      %p243 = pneg %p242
      // Predicated region
      $region41: #{tpu_custom_call.1} parent=5 // pred_check
        _
      $region42: #{tpu_custom_call.1} parent=5 // pred_check_branch
        %245 = sbr.rel (%p242) target = $region44
      $region43: #{tpu_custom_call.1} parent=5 // pred_region
        %s246 = ssub.s32 %s19, 1
        %s247 = sand.u32 %s32, 1
        %s248 = scalar_lea.sflag [#allocation3], %s247
        %s249 = sand.u32 %s32, 1
        %s250 = smul.addr %s249, 256
        %s251 = scalar_lea.vmem [#allocation2], %s250
        // Predicated region
        $region45: #{tpu_custom_call.1} parent=43 // pred_check
          %p252 = pneg %p45
        $region46: #{tpu_custom_call.1} parent=43 // pred_check_branch
          %254 = sbr.rel (%p252) target = $region48
        $region47: #{tpu_custom_call.1} parent=43 // pred_region
          %255 = dma.done %s248, 4096
        $region48: #{tpu_custom_call.1} parent=43 // pred_fallthru
          _
        // Predicated region
        $region49: #{tpu_custom_call.1} parent=43 // pred_check
          %p256 = pneg %p87
        $region50: #{tpu_custom_call.1} parent=43 // pred_check_branch
          %258 = sbr.rel (%p256) target = $region52
        $region51: #{tpu_custom_call.1} parent=43 // pred_region
          %259 = dma.done [#allocation6], 16
        $region52: #{tpu_custom_call.1} parent=43 // pred_fallthru
          _
        %s260 = sand.u32 %s32, 1
        %s261 = scalar_lea.sflag [#allocation3], %s260
        %s262 = sand.u32 %s32, 1
        %s263 = smul.addr %s262, 256
        %s264 = scalar_lea.vmem [#allocation2], %s263
        %p265 = pneg %p45
        %p266 = pneg %p42
        %p267 = pneg %p66
        %p268 = pneg %p63
        %p269 = pneg %p87
        %p270 = pneg %p84
        %p271 = pneg %p108
        %p272 = pneg %p105
        %p273 = pneg %p129
        %p274 = pneg %p126
        %p275 = pneg %p150
        %p276 = pneg %p147
        %p277 = pneg %p176
        %p278 = pneg %p173
        %s279 = sand.u32 %s163, 1
        %s280 = scalar_lea.sflag [#allocation4], %s279
        %s281 = sand.u32 %s163, 1
        %s282 = smul.addr %s281, 64
        %s283 = scalar_lea.vmem [#allocation7], %s282
        %s284 = smul.u32 4, %s24
        %s285 = smul.u32 4, %s24
        %v286 = vld [vmem:[%s251] sm:$0xff]
        %v287 = vld [vmem:[%s251 + $0x8] sm:$0xff]
        %v288 = vld [vmem:[%s251 + $0x10] sm:$0xff]
        %v289 = vld [vmem:[%s251 + $0x18] sm:$0xff]
        %v290 = vld [vmem:[%s251 + $0x20] sm:$0xff]
        %v291 = vld [vmem:[%s251 + $0x28] sm:$0xff]
        %v292 = vld [vmem:[%s251 + $0x30] sm:$0xff]
        %v293 = vld [vmem:[%s251 + $0x38] sm:$0xff]
        %v294 = vld [vmem:[%s251 + $0x40] sm:$0xff]
        %v295 = vld [vmem:[%s251 + $0x48] sm:$0xff]
        %v296 = vld [vmem:[%s251 + $0x50] sm:$0xff]
        %v297 = vld [vmem:[%s251 + $0x58] sm:$0xff]
        %v298 = vld [vmem:[%s251 + $0x60] sm:$0xff]
        %v299 = vld [vmem:[%s251 + $0x68] sm:$0xff]
        %v300 = vld [vmem:[%s251 + $0x70] sm:$0xff]
        %v301 = vld [vmem:[%s251 + $0x78] sm:$0xff]
        %v302 = vld [vmem:[%s251 + $0x80] sm:$0xff]
        %v303 = vld [vmem:[%s251 + $0x88] sm:$0xff]
        %v304 = vld [vmem:[%s251 + $0x90] sm:$0xff]
        %v305 = vld [vmem:[%s251 + $0x98] sm:$0xff]
        %v306 = vld [vmem:[%s251 + $0xa0] sm:$0xff]
        %v307 = vld [vmem:[%s251 + $0xa8] sm:$0xff]
        %v308 = vld [vmem:[%s251 + $0xb0] sm:$0xff]
        %v309 = vld [vmem:[%s251 + $0xb8] sm:$0xff]
        %v310 = vld [vmem:[%s251 + $0xc0] sm:$0xff]
        %v311 = vld [vmem:[%s251 + $0xc8] sm:$0xff]
        %v312 = vld [vmem:[%s251 + $0xd0] sm:$0xff]
        %v313 = vld [vmem:[%s251 + $0xd8] sm:$0xff]
        %v314 = vld [vmem:[%s251 + $0xe0] sm:$0xff]
        %v315 = vld [vmem:[%s251 + $0xe8] sm:$0xff]
        %v316 = vld [vmem:[%s251 + $0xf0] sm:$0xff]
        %v317 = vld [vmem:[%s251 + $0xf8] sm:$0xff]
        %v318 = vld [vmem:[%s1] sm:$0xf]
        %v319 = vld [vmem:[#allocation5] sm:$0x1]
        %v320 = vld [vmem:[%s3] sm:$0xff]
        %v321 = vld [vmem:[%s3 + $0x8] sm:$0xff]
        %v322 = vld [vmem:[%s4] sm:$0xff]
        %v323 = vld [vmem:[%s4 + $0x8] sm:$0xff]
        %v324 = vld [vmem:[%s5] sm:$0xff]
        %v325 = vld [vmem:[%s5 + $0x8] sm:$0xff]
        %v328 = vunpack.c.l.s4 1966171168
        %v329 = vunpack.c.0.s8 %v328
        %v330 = vlaneseq
        %v331 = vshrl.u32 %v330, 7
        %v332 = vsub.s32 %v329, %v331
        %v333 = vrot.slane %v318, %v332
        %v334 = vcombine.high %v333, %v333
        %v336 = vunpack.c.l.s4 1966171168
        %v337 = vunpack.c.0.s8 %v336
        %v338 = vlaneseq
        %v339 = vshrl.u32 %v338, 7
        %v340 = vsub.s32 %v337, %v339
        %v341 = vrot.slane %v333, %v340
        %v343 = vunpack.c.l.s4 1966171168
        %v344 = vunpack.c.0.s8 %v343
        %v345 = vlaneseq
        %v346 = vshrl.u32 %v345, 7
        %v347 = vsub.s32 %v344, %v346
        %v348 = vrot.slane %v334, %v347
        %v349 = vcombine.high %v341, %v341
        %v350 = vcombine.high %v348, %v348
        %v351 = vlaneseq
        %v352 = vshrl.u32 %v351, 7
        %v353 = vsub.s32 0, %v352
        %v354 = vrot.slane %v341, %v353
        %v355 = vlaneseq
        %v356 = vshrl.u32 %v355, 7
        %v357 = vsub.s32 0, %v356
        %v358 = vrot.slane %v348, %v357
        %v359 = vlaneseq
        %v360 = vshrl.u32 %v359, 7
        %v361 = vsub.s32 0, %v360
        %v362 = vrot.slane %v349, %v361
        %v363 = vlaneseq
        %v364 = vshrl.u32 %v363, 7
        %v365 = vsub.s32 0, %v364
        %v366 = vrot.slane %v350, %v365
        %367 = vset.pattern.permute.xlu0 0
        %368 = vperm.xlu0 %367, %v354
        %v369 = vpop.permute.xlu0 %368
        %371 = vset.pattern.permute.xlu0 0
        %372 = vperm.xlu0 %371, %v358
        %v373 = vpop.permute.xlu0 %372
        %375 = vset.pattern.permute.xlu0 0
        %376 = vperm.xlu0 %375, %v362
        %v377 = vpop.permute.xlu0 %376
        %379 = vset.pattern.permute.xlu0 0
        %380 = vperm.xlu0 %379, %v366
        %v381 = vpop.permute.xlu0 %380
        %v383 = vmul.f32 %v286, %v369
        %v384 = vmul.f32 %v287, %v369
        %v385 = vmul.f32 %v288, %v373
        %v386 = vmul.f32 %v289, %v373
        %v387 = vmul.f32 %v290, %v377
        %v388 = vmul.f32 %v291, %v377
        %v389 = vmul.f32 %v292, %v381
        %v390 = vmul.f32 %v293, %v381
        %v391 = vmul.f32 %v294, %v369
        %v392 = vmul.f32 %v295, %v369
        %v393 = vmul.f32 %v296, %v373
        %v394 = vmul.f32 %v297, %v373
        %v395 = vmul.f32 %v298, %v377
        %v396 = vmul.f32 %v299, %v377
        %v397 = vmul.f32 %v300, %v381
        %v398 = vmul.f32 %v301, %v381
        %v399 = vmul.f32 %v302, %v369
        %v400 = vmul.f32 %v303, %v369
        %v401 = vmul.f32 %v304, %v373
        %v402 = vmul.f32 %v305, %v373
        %v403 = vmul.f32 %v306, %v377
        %v404 = vmul.f32 %v307, %v377
        %v405 = vmul.f32 %v308, %v381
        %v406 = vmul.f32 %v309, %v381
        %v407 = vmul.f32 %v310, %v369
        %v408 = vmul.f32 %v311, %v369
        %v409 = vmul.f32 %v312, %v373
        %v410 = vmul.f32 %v313, %v373
        %v411 = vmul.f32 %v314, %v377
        %v412 = vmul.f32 %v315, %v377
        %v413 = vmul.f32 %v316, %v381
        %v414 = vmul.f32 %v317, %v381
        %vm415 = vcmask 130048
        %v416 = vsel %vm415, %v383, 0.0
        %v417 = vsel %vm415, %v385, 0.0
        %v418 = vadd.f32 %v416, %v417
        %v419 = vsel %vm415, %v387, 0.0
        %v420 = vadd.f32 %v418, %v419
        %v421 = vsel %vm415, %v389, 0.0
        %v422 = vadd.f32 %v420, %v421
        %v423 = vsel %vm415, %v384, 0.0
        %v424 = vsel %vm415, %v386, 0.0
        %v425 = vadd.f32 %v423, %v424
        %v426 = vsel %vm415, %v388, 0.0
        %v427 = vadd.f32 %v425, %v426
        %v428 = vsel %vm415, %v390, 0.0
        %v429 = vadd.f32 %v427, %v428
        %v430 = vsel %vm415, %v391, 0.0
        %v431 = vsel %vm415, %v393, 0.0
        %v432 = vadd.f32 %v430, %v431
        %v433 = vsel %vm415, %v395, 0.0
        %v434 = vadd.f32 %v432, %v433
        %v435 = vsel %vm415, %v397, 0.0
        %v436 = vadd.f32 %v434, %v435
        %v437 = vsel %vm415, %v392, 0.0
        %v438 = vsel %vm415, %v394, 0.0
        %v439 = vadd.f32 %v437, %v438
        %v440 = vsel %vm415, %v396, 0.0
        %v441 = vadd.f32 %v439, %v440
        %v442 = vsel %vm415, %v398, 0.0
        %v443 = vadd.f32 %v441, %v442
        %v444 = vsel %vm415, %v399, 0.0
        %v445 = vsel %vm415, %v401, 0.0
        %v446 = vadd.f32 %v444, %v445
        %v447 = vsel %vm415, %v403, 0.0
        %v448 = vadd.f32 %v446, %v447
        %v449 = vsel %vm415, %v405, 0.0
        %v450 = vadd.f32 %v448, %v449
        %v451 = vsel %vm415, %v400, 0.0
        %v452 = vsel %vm415, %v402, 0.0
        %v453 = vadd.f32 %v451, %v452
        %v454 = vsel %vm415, %v404, 0.0
        %v455 = vadd.f32 %v453, %v454
        %v456 = vsel %vm415, %v406, 0.0
        %v457 = vadd.f32 %v455, %v456
        %v458 = vsel %vm415, %v407, 0.0
        %v459 = vsel %vm415, %v409, 0.0
        %v460 = vadd.f32 %v458, %v459
        %v461 = vsel %vm415, %v411, 0.0
        %v462 = vadd.f32 %v460, %v461
        %v463 = vsel %vm415, %v413, 0.0
        %v464 = vadd.f32 %v462, %v463
        %v465 = vsel %vm415, %v408, 0.0
        %v466 = vsel %vm415, %v410, 0.0
        %v467 = vadd.f32 %v465, %v466
        %v468 = vsel %vm415, %v412, 0.0
        %v469 = vadd.f32 %v467, %v468
        %v470 = vsel %vm415, %v414, 0.0
        %v471 = vadd.f32 %v469, %v470
        %v473 = vlaneseq
        %v474 = vshrl.u32 %v473, 7
        %v475 = vsub.s32 0, %v474
        %v476 = vrot.slane %v319, %v475
        %v478 = vmul.f32 %v286, %v476
        %v479 = vmul.f32 %v287, %v476
        %v480 = vmul.f32 %v288, %v476
        %v481 = vmul.f32 %v289, %v476
        %v482 = vmul.f32 %v290, %v476
        %v483 = vmul.f32 %v291, %v476
        %v484 = vmul.f32 %v292, %v476
        %v485 = vmul.f32 %v293, %v476
        %v486 = vmul.f32 %v294, %v476
        %v487 = vmul.f32 %v295, %v476
        %v488 = vmul.f32 %v296, %v476
        %v489 = vmul.f32 %v297, %v476
        %v490 = vmul.f32 %v298, %v476
        %v491 = vmul.f32 %v299, %v476
        %v492 = vmul.f32 %v300, %v476
        %v493 = vmul.f32 %v301, %v476
        %v494 = vmul.f32 %v302, %v476
        %v495 = vmul.f32 %v303, %v476
        %v496 = vmul.f32 %v304, %v476
        %v497 = vmul.f32 %v305, %v476
        %v498 = vmul.f32 %v306, %v476
        %v499 = vmul.f32 %v307, %v476
        %v500 = vmul.f32 %v308, %v476
        %v501 = vmul.f32 %v309, %v476
        %v502 = vmul.f32 %v310, %v476
        %v503 = vmul.f32 %v311, %v476
        %v504 = vmul.f32 %v312, %v476
        %v505 = vmul.f32 %v313, %v476
        %v506 = vmul.f32 %v314, %v476
        %v507 = vmul.f32 %v315, %v476
        %v508 = vmul.f32 %v316, %v476
        %v509 = vmul.f32 %v317, %v476
        %v510 = vsel %vm415, %v478, 0.0
        %511 = vadd.xlane.f32.xlu0 %v510
        %v512 = vpop.xlane.xlu0 %511
        %v513 = vsel %vm415, %v479, 0.0
        %514 = vadd.xlane.f32.xlu0 %v513
        %v515 = vpop.xlane.xlu0 %514
        %v516 = vsel %vm415, %v480, 0.0
        %517 = vadd.xlane.f32.xlu0 %v516
        %v518 = vpop.xlane.xlu0 %517
        %v519 = vsel %vm415, %v481, 0.0
        %520 = vadd.xlane.f32.xlu0 %v519
        %v521 = vpop.xlane.xlu0 %520
        %v522 = vsel %vm415, %v482, 0.0
        %523 = vadd.xlane.f32.xlu0 %v522
        %v524 = vpop.xlane.xlu0 %523
        %v525 = vsel %vm415, %v483, 0.0
        %526 = vadd.xlane.f32.xlu0 %v525
        %v527 = vpop.xlane.xlu0 %526
        %v528 = vsel %vm415, %v484, 0.0
        %529 = vadd.xlane.f32.xlu0 %v528
        %v530 = vpop.xlane.xlu0 %529
        %v531 = vsel %vm415, %v485, 0.0
        %532 = vadd.xlane.f32.xlu0 %v531
        %v533 = vpop.xlane.xlu0 %532
        %v534 = vsel %vm415, %v486, 0.0
        %535 = vadd.xlane.f32.xlu0 %v534
        %v536 = vpop.xlane.xlu0 %535
        %v537 = vsel %vm415, %v487, 0.0
        %538 = vadd.xlane.f32.xlu0 %v537
        %v539 = vpop.xlane.xlu0 %538
        %v540 = vsel %vm415, %v488, 0.0
        %541 = vadd.xlane.f32.xlu0 %v540
        %v542 = vpop.xlane.xlu0 %541
        %v543 = vsel %vm415, %v489, 0.0
        %544 = vadd.xlane.f32.xlu0 %v543
        %v545 = vpop.xlane.xlu0 %544
        %v546 = vsel %vm415, %v490, 0.0
        %547 = vadd.xlane.f32.xlu0 %v546
        %v548 = vpop.xlane.xlu0 %547
        %v549 = vsel %vm415, %v491, 0.0
        %550 = vadd.xlane.f32.xlu0 %v549
        %v551 = vpop.xlane.xlu0 %550
        %v552 = vsel %vm415, %v492, 0.0
        %553 = vadd.xlane.f32.xlu0 %v552
        %v554 = vpop.xlane.xlu0 %553
        %v555 = vsel %vm415, %v493, 0.0
        %556 = vadd.xlane.f32.xlu0 %v555
        %v557 = vpop.xlane.xlu0 %556
        %v558 = vsel %vm415, %v494, 0.0
        %559 = vadd.xlane.f32.xlu0 %v558
        %v560 = vpop.xlane.xlu0 %559
        %v561 = vsel %vm415, %v495, 0.0
        %562 = vadd.xlane.f32.xlu0 %v561
        %v563 = vpop.xlane.xlu0 %562
        %v564 = vsel %vm415, %v496, 0.0
        %565 = vadd.xlane.f32.xlu0 %v564
        %v566 = vpop.xlane.xlu0 %565
        %v567 = vsel %vm415, %v497, 0.0
        %568 = vadd.xlane.f32.xlu0 %v567
        %v569 = vpop.xlane.xlu0 %568
        %v570 = vsel %vm415, %v498, 0.0
        %571 = vadd.xlane.f32.xlu0 %v570
        %v572 = vpop.xlane.xlu0 %571
        %v573 = vsel %vm415, %v499, 0.0
        %574 = vadd.xlane.f32.xlu0 %v573
        %v575 = vpop.xlane.xlu0 %574
        %v576 = vsel %vm415, %v500, 0.0
        %577 = vadd.xlane.f32.xlu0 %v576
        %v578 = vpop.xlane.xlu0 %577
        %v579 = vsel %vm415, %v501, 0.0
        %580 = vadd.xlane.f32.xlu0 %v579
        %v581 = vpop.xlane.xlu0 %580
        %v582 = vsel %vm415, %v502, 0.0
        %583 = vadd.xlane.f32.xlu0 %v582
        %v584 = vpop.xlane.xlu0 %583
        %v585 = vsel %vm415, %v503, 0.0
        %586 = vadd.xlane.f32.xlu0 %v585
        %v587 = vpop.xlane.xlu0 %586
        %v588 = vsel %vm415, %v504, 0.0
        %589 = vadd.xlane.f32.xlu0 %v588
        %v590 = vpop.xlane.xlu0 %589
        %v591 = vsel %vm415, %v505, 0.0
        %592 = vadd.xlane.f32.xlu0 %v591
        %v593 = vpop.xlane.xlu0 %592
        %v594 = vsel %vm415, %v506, 0.0
        %595 = vadd.xlane.f32.xlu0 %v594
        %v596 = vpop.xlane.xlu0 %595
        %v597 = vsel %vm415, %v507, 0.0
        %598 = vadd.xlane.f32.xlu0 %v597
        %v599 = vpop.xlane.xlu0 %598
        %v600 = vsel %vm415, %v508, 0.0
        %601 = vadd.xlane.f32.xlu0 %v600
        %v602 = vpop.xlane.xlu0 %601
        %v603 = vsel %vm415, %v509, 0.0
        %604 = vadd.xlane.f32.xlu0 %v603
        %v605 = vpop.xlane.xlu0 %604
        %v607 = vsel %vm415, %v422, 0
        %v610 = vsel %vm415, %v429, 0
        %v613 = vsel %vm415, %v436, 0
        %v616 = vsel %vm415, %v443, 0
        %v619 = vsel %vm415, %v450, 0
        %v622 = vsel %vm415, %v457, 0
        %v625 = vsel %vm415, %v464, 0
        %v628 = vsel %vm415, %v471, 0
        %630 = vmatprep.subr.mxu0 0.0
        %631 = vmatpush1.msra.mxu0 %v320
        %632 = vmatprep.subr.mxu0 0.0
        %633 = vmatpush1.msra.mxu0 %v321
        %634 = vmatprep.subr.mxu0 0.0
        %635 = vmatpush1.msra.mxu0 0.0
        %636 = vmatprep.subr.mxu0 0.0
        %637 = vmatpush1.msra.mxu0 0.0
        %638 = vmatprep.subr.mxu0 0.0
        %639 = vmatpush1.msra.mxu0 0.0
        %640 = vmatprep.subr.mxu0 0.0
        %641 = vmatpush1.msra.mxu0 0.0
        %642 = vmatprep.subr.mxu0 0.0
        %643 = vmatpush1.msra.mxu0 0.0
        %644 = vmatprep.subr.mxu0 0.0
        %645 = vmatpush1.msra.mxu0 0.0
        %646 = vmatprep.subr.mxu0 0.0
        %647 = vmatpush1.msra.mxu0 0.0
        %648 = vmatprep.subr.mxu0 0.0
        %649 = vmatpush1.msra.mxu0 0.0
        %650 = vmatprep.subr.mxu0 0.0
        %651 = vmatpush1.msra.mxu0 0.0
        %652 = vmatprep.subr.mxu0 0.0
        %653 = vmatpush1.msra.mxu0 0.0
        %654 = vmatprep.subr.mxu0 0.0
        %655 = vmatpush1.msra.mxu0 0.0
        %656 = vmatprep.subr.mxu0 0.0
        %657 = vmatpush1.msra.mxu0 0.0
        %658 = vmatprep.subr.mxu0 0.0
        %659 = vmatpush1.msra.mxu0 0.0
        %660 = vmatprep.subr.mxu0 0.0
        %661 = vmatpush1.msra.mxu0 0.0
        %662 = vmatprep.subr.mxu0 0.0
        %663 = vmatpush1.msra.mxu0 0.0
        %664 = vmatprep.subr.mxu0 0.0
        %665 = vmatpush1.msra.mxu0 0.0
        %666 = vmatprep.subr.mxu0 0.0
        %667 = vmatpush1.msra.mxu0 0.0
        %668 = vmatprep.subr.mxu0 0.0
        %669 = vmatpush1.msra.mxu0 0.0
        %670 = vmatprep.subr.mxu0 0.0
        %671 = vmatpush1.msra.mxu0 0.0
        %672 = vmatprep.subr.mxu0 0.0
        %673 = vmatpush1.msra.mxu0 0.0
        %674 = vmatprep.subr.mxu0 0.0
        %675 = vmatpush1.msra.mxu0 0.0
        %676 = vmatprep.subr.mxu0 0.0
        %677 = vmatpush1.msra.mxu0 0.0
        %678 = vmatprep.subr.mxu0 0.0
        %679 = vmatpush1.msra.mxu0 0.0
        %680 = vmatprep.subr.mxu0 0.0
        %681 = vmatpush1.msra.mxu0 0.0
        %682 = vmatprep.subr.mxu0 0.0
        %683 = vmatpush1.msra.mxu0 0.0
        %684 = vmatprep.subr.mxu0 0.0
        %685 = vmatpush1.msra.mxu0 0.0
        %686 = vmatprep.subr.mxu0 0.0
        %687 = vmatpush1.msra.mxu0 0.0
        %688 = vmatprep.subr.mxu0 0.0
        %689 = vmatpush1.msra.mxu0 0.0
        %690 = vmatprep.subr.mxu0 0.0
        %691 = vmatpush1.msra.mxu0 0.0
        %692 = vmatprep.subr.mxu0 0.0
        %693 = vmatpush1.msra.mxu0 0.0
        %694 = vmatprep.mubr.f32.mxu0 0.0
        %695 = vmatmul.mubr.f32.gmra.mrb[0].mxu0 %v607
        %v696 = vpop.f32.mrb[0].mxu0
        %v697 = vadd.f32 0.0, %v696
        %v698 = vpop.f32.mrb[0].mxu0
        %699 = vmatprep.mubr.f32.mxu0 0.0
        %700 = vmatmul.mubr.f32.gmra.mrb[0].mxu0 %v610
        %v701 = vpop.f32.mrb[0].mxu0
        %v702 = vadd.f32 0.0, %v701
        %v703 = vpop.f32.mrb[0].mxu0
        %704 = vmatprep.mubr.f32.mxu0 0.0
        %705 = vmatmul.mubr.f32.gmra.mrb[0].mxu0 %v613
        %v706 = vpop.f32.mrb[0].mxu0
        %v707 = vadd.f32 0.0, %v706
        %v708 = vpop.f32.mrb[0].mxu0
        %709 = vmatprep.mubr.f32.mxu0 0.0
        %710 = vmatmul.mubr.f32.gmra.mrb[0].mxu0 %v616
        %v711 = vpop.f32.mrb[0].mxu0
        %v712 = vadd.f32 0.0, %v711
        %v713 = vpop.f32.mrb[0].mxu0
        %714 = vmatprep.mubr.f32.mxu0 0.0
        %715 = vmatmul.mubr.f32.gmra.mrb[0].mxu0 %v619
        %v716 = vpop.f32.mrb[0].mxu0
        %v717 = vadd.f32 0.0, %v716
        %v718 = vpop.f32.mrb[0].mxu0
        %719 = vmatprep.mubr.f32.mxu0 0.0
        %720 = vmatmul.mubr.f32.gmra.mrb[0].mxu0 %v622
        %v721 = vpop.f32.mrb[0].mxu0
        %v722 = vadd.f32 0.0, %v721
        %v723 = vpop.f32.mrb[0].mxu0
        %724 = vmatprep.mubr.f32.mxu0 0.0
        %725 = vmatmul.mubr.f32.gmra.mrb[0].mxu0 %v625
        %v726 = vpop.f32.mrb[0].mxu0
        %v727 = vadd.f32 0.0, %v726
        %v728 = vpop.f32.mrb[0].mxu0
        %729 = vmatprep.mubr.f32.mxu0 0.0
        %730 = vmatmul.mubr.f32.gmra.mrb[0].mxu0 %v628
        %v731 = vpop.f32.mrb[0].mxu0
        %v732 = vadd.f32 0.0, %v731
        %v733 = vpop.f32.mrb[0].mxu0
        %734 = vdwg.mxu0
        %v743 = vlaneseq
        %v744 = vand.u32 %v743, 127
        %v745 = vlaneseq
        %v746 = vshrl.u32 %v745, 7
        %v747 = vsub.s32 %v744, %v746
        %v748 = vrot.slane %v512, %v747
        %v749 = vadd.s32 %v744, 4294967288
        %v750 = vlaneseq
        %v751 = vshrl.u32 %v750, 7
        %v752 = vsub.s32 %v749, %v751
        %v753 = vrot.slane %v515, %v752
        %vm754 = vcmask 130112
        %v755 = vsel %vm754, %v753, %v748
        %v756 = vlaneseq
        %v757 = vshrl.u32 %v756, 7
        %v758 = vsub.s32 %v744, %v757
        %v759 = vrot.slane %v518, %v758
        %v760 = vlaneseq
        %v761 = vshrl.u32 %v760, 7
        %v762 = vsub.s32 %v749, %v761
        %v763 = vrot.slane %v521, %v762
        %v764 = vsel %vm754, %v763, %v759
        %v765 = vlaneseq
        %v766 = vshrl.u32 %v765, 7
        %v767 = vsub.s32 %v744, %v766
        %v768 = vrot.slane %v524, %v767
        %v769 = vlaneseq
        %v770 = vshrl.u32 %v769, 7
        %v771 = vsub.s32 %v749, %v770
        %v772 = vrot.slane %v527, %v771
        %v773 = vsel %vm754, %v772, %v768
        %v774 = vlaneseq
        %v775 = vshrl.u32 %v774, 7
        %v776 = vsub.s32 %v744, %v775
        %v777 = vrot.slane %v530, %v776
        %v778 = vlaneseq
        %v779 = vshrl.u32 %v778, 7
        %v780 = vsub.s32 %v749, %v779
        %v781 = vrot.slane %v533, %v780
        %v782 = vsel %vm754, %v781, %v777
        %vm783 = vcmask 1041409
        %v784 = vsel %vm783, %v764, %v755
        %vm785 = vcmask 1042434
        %v786 = vsel %vm785, %v773, %v784
        %vm787 = vcmask 1043459
        %v788 = vsel %vm787, %v782, %v786
        %vm789 = vcmask 31744
        %v791 = vsel %vm789, %v697, 0
        %v794 = vsel %vm789, %v702, 0
        %vm796 = vcmask 1043456
        %v797 = vsel %vm796, %v788, 0
        %799 = vmatprep.subr.mxu0 0.0
        %800 = vmatpush1.msra.mxu0 %v797
        %801 = vmatprep.subr.mxu0 0.0
        %802 = vmatpush1.msra.mxu0 0.0
        %803 = vmatprep.subr.mxu0 0.0
        %804 = vmatpush1.msra.mxu0 0.0
        %805 = vmatprep.subr.mxu0 0.0
        %806 = vmatpush1.msra.mxu0 0.0
        %807 = vmatprep.subr.mxu0 0.0
        %808 = vmatpush1.msra.mxu0 0.0
        %809 = vmatprep.subr.mxu0 0.0
        %810 = vmatpush1.msra.mxu0 0.0
        %811 = vmatprep.subr.mxu0 0.0
        %812 = vmatpush1.msra.mxu0 0.0
        %813 = vmatprep.subr.mxu0 0.0
        %814 = vmatpush1.msra.mxu0 0.0
        %815 = vmatprep.subr.mxu0 0.0
        %816 = vmatpush1.msra.mxu0 0.0
        %817 = vmatprep.subr.mxu0 0.0
        %818 = vmatpush1.msra.mxu0 0.0
        %819 = vmatprep.subr.mxu0 0.0
        %820 = vmatpush1.msra.mxu0 0.0
        %821 = vmatprep.subr.mxu0 0.0
        %822 = vmatpush1.msra.mxu0 0.0
        %823 = vmatprep.subr.mxu0 0.0
        %824 = vmatpush1.msra.mxu0 0.0
        %825 = vmatprep.subr.mxu0 0.0
        %826 = vmatpush1.msra.mxu0 0.0
        %827 = vmatprep.subr.mxu0 0.0
        %828 = vmatpush1.msra.mxu0 0.0
        %829 = vmatprep.subr.mxu0 0.0
        %830 = vmatpush1.msra.mxu0 0.0
        %831 = vmatprep.subr.mxu0 0.0
        %832 = vmatpush1.msra.mxu0 0.0
        %833 = vmatprep.subr.mxu0 0.0
        %834 = vmatpush1.msra.mxu0 0.0
        %835 = vmatprep.subr.mxu0 0.0
        %836 = vmatpush1.msra.mxu0 0.0
        %837 = vmatprep.subr.mxu0 0.0
        %838 = vmatpush1.msra.mxu0 0.0
        %839 = vmatprep.subr.mxu0 0.0
        %840 = vmatpush1.msra.mxu0 0.0
        %841 = vmatprep.subr.mxu0 0.0
        %842 = vmatpush1.msra.mxu0 0.0
        %843 = vmatprep.subr.mxu0 0.0
        %844 = vmatpush1.msra.mxu0 0.0
        %845 = vmatprep.subr.mxu0 0.0
        %846 = vmatpush1.msra.mxu0 0.0
        %847 = vmatprep.subr.mxu0 0.0
        %848 = vmatpush1.msra.mxu0 0.0
        %849 = vmatprep.subr.mxu0 0.0
        %850 = vmatpush1.msra.mxu0 0.0
        %851 = vmatprep.subr.mxu0 0.0
        %852 = vmatpush1.msra.mxu0 0.0
        %853 = vmatprep.subr.mxu0 0.0
        %854 = vmatpush1.msra.mxu0 0.0
        %855 = vmatprep.subr.mxu0 0.0
        %856 = vmatpush1.msra.mxu0 0.0
        %857 = vmatprep.subr.mxu0 0.0
        %858 = vmatpush1.msra.mxu0 0.0
        %859 = vmatprep.subr.mxu0 0.0
        %860 = vmatpush1.msra.mxu0 0.0
        %861 = vmatprep.subr.mxu0 0.0
        %862 = vmatpush1.msra.mxu0 0.0
        %863 = vmatprep.mubr.f32.mxu0 0.0
        %864 = vmatmul.mubr.f32.gmra.mrb[0].mxu0 %v791
        %v865 = vpop.f32.mrb[0].mxu0
        %v866 = vadd.f32 %v322, %v865
        %v867 = vpop.f32.mrb[0].mxu0
        %868 = vmatprep.mubr.f32.mxu0 0.0
        %869 = vmatmul.mubr.f32.gmra.mrb[0].mxu0 %v794
        %v870 = vpop.f32.mrb[0].mxu0
        %v871 = vadd.f32 %v323, %v870
        %v872 = vpop.f32.mrb[0].mxu0
        %873 = vdwg.mxu0
        %v882 = vlaneseq
        %v883 = vshrl.u32 %v882, 7
        %v884 = vsub.s32 %v744, %v883
        %v885 = vrot.slane %v536, %v884
        %v886 = vlaneseq
        %v887 = vshrl.u32 %v886, 7
        %v888 = vsub.s32 %v749, %v887
        %v889 = vrot.slane %v539, %v888
        %v890 = vsel %vm754, %v889, %v885
        %v891 = vlaneseq
        %v892 = vshrl.u32 %v891, 7
        %v893 = vsub.s32 %v744, %v892
        %v894 = vrot.slane %v542, %v893
        %v895 = vlaneseq
        %v896 = vshrl.u32 %v895, 7
        %v897 = vsub.s32 %v749, %v896
        %v898 = vrot.slane %v545, %v897
        %v899 = vsel %vm754, %v898, %v894
        %v900 = vlaneseq
        %v901 = vshrl.u32 %v900, 7
        %v902 = vsub.s32 %v744, %v901
        %v903 = vrot.slane %v548, %v902
        %v904 = vlaneseq
        %v905 = vshrl.u32 %v904, 7
        %v906 = vsub.s32 %v749, %v905
        %v907 = vrot.slane %v551, %v906
        %v908 = vsel %vm754, %v907, %v903
        %v909 = vlaneseq
        %v910 = vshrl.u32 %v909, 7
        %v911 = vsub.s32 %v744, %v910
        %v912 = vrot.slane %v554, %v911
        %v913 = vlaneseq
        %v914 = vshrl.u32 %v913, 7
        %v915 = vsub.s32 %v749, %v914
        %v916 = vrot.slane %v557, %v915
        %v917 = vsel %vm754, %v916, %v912
        %v918 = vsel %vm783, %v899, %v890
        %v919 = vsel %vm785, %v908, %v918
        %v920 = vsel %vm787, %v917, %v919
        %v922 = vsel %vm789, %v707, 0
        %v925 = vsel %vm789, %v712, 0
        %v927 = vsel %vm796, %v920, 0
        %929 = vmatprep.subr.mxu0 0.0
        %930 = vmatpush1.msra.mxu0 %v927
        %931 = vmatprep.subr.mxu0 0.0
        %932 = vmatpush1.msra.mxu0 0.0
        %933 = vmatprep.subr.mxu0 0.0
        %934 = vmatpush1.msra.mxu0 0.0
        %935 = vmatprep.subr.mxu0 0.0
        %936 = vmatpush1.msra.mxu0 0.0
        %937 = vmatprep.subr.mxu0 0.0
        %938 = vmatpush1.msra.mxu0 0.0
        %939 = vmatprep.subr.mxu0 0.0
        %940 = vmatpush1.msra.mxu0 0.0
        %941 = vmatprep.subr.mxu0 0.0
        %942 = vmatpush1.msra.mxu0 0.0
        %943 = vmatprep.subr.mxu0 0.0
        %944 = vmatpush1.msra.mxu0 0.0
        %945 = vmatprep.subr.mxu0 0.0
        %946 = vmatpush1.msra.mxu0 0.0
        %947 = vmatprep.subr.mxu0 0.0
        %948 = vmatpush1.msra.mxu0 0.0
        %949 = vmatprep.subr.mxu0 0.0
        %950 = vmatpush1.msra.mxu0 0.0
        %951 = vmatprep.subr.mxu0 0.0
        %952 = vmatpush1.msra.mxu0 0.0
        %953 = vmatprep.subr.mxu0 0.0
        %954 = vmatpush1.msra.mxu0 0.0
        %955 = vmatprep.subr.mxu0 0.0
        %956 = vmatpush1.msra.mxu0 0.0
        %957 = vmatprep.subr.mxu0 0.0
        %958 = vmatpush1.msra.mxu0 0.0
        %959 = vmatprep.subr.mxu0 0.0
        %960 = vmatpush1.msra.mxu0 0.0
        %961 = vmatprep.subr.mxu0 0.0
        %962 = vmatpush1.msra.mxu0 0.0
        %963 = vmatprep.subr.mxu0 0.0
        %964 = vmatpush1.msra.mxu0 0.0
        %965 = vmatprep.subr.mxu0 0.0
        %966 = vmatpush1.msra.mxu0 0.0
        %967 = vmatprep.subr.mxu0 0.0
        %968 = vmatpush1.msra.mxu0 0.0
        %969 = vmatprep.subr.mxu0 0.0
        %970 = vmatpush1.msra.mxu0 0.0
        %971 = vmatprep.subr.mxu0 0.0
        %972 = vmatpush1.msra.mxu0 0.0
        %973 = vmatprep.subr.mxu0 0.0
        %974 = vmatpush1.msra.mxu0 0.0
        %975 = vmatprep.subr.mxu0 0.0
        %976 = vmatpush1.msra.mxu0 0.0
        %977 = vmatprep.subr.mxu0 0.0
        %978 = vmatpush1.msra.mxu0 0.0
        %979 = vmatprep.subr.mxu0 0.0
        %980 = vmatpush1.msra.mxu0 0.0
        %981 = vmatprep.subr.mxu0 0.0
        %982 = vmatpush1.msra.mxu0 0.0
        %983 = vmatprep.subr.mxu0 0.0
        %984 = vmatpush1.msra.mxu0 0.0
        %985 = vmatprep.subr.mxu0 0.0
        %986 = vmatpush1.msra.mxu0 0.0
        %987 = vmatprep.subr.mxu0 0.0
        %988 = vmatpush1.msra.mxu0 0.0
        %989 = vmatprep.subr.mxu0 0.0
        %990 = vmatpush1.msra.mxu0 0.0
        %991 = vmatprep.subr.mxu0 0.0
        %992 = vmatpush1.msra.mxu0 0.0
        %993 = vmatprep.mubr.f32.mxu0 0.0
        %994 = vmatmul.mubr.f32.gmra.mrb[0].mxu0 %v922
        %v995 = vpop.f32.mrb[0].mxu0
        %v996 = vadd.f32 %v322, %v995
        %v997 = vpop.f32.mrb[0].mxu0
        %998 = vmatprep.mubr.f32.mxu0 0.0
        %999 = vmatmul.mubr.f32.gmra.mrb[0].mxu0 %v925
        %v1000 = vpop.f32.mrb[0].mxu0
        %v1001 = vadd.f32 %v323, %v1000
        %v1002 = vpop.f32.mrb[0].mxu0
        %1003 = vdwg.mxu0
        %v1012 = vlaneseq
        %v1013 = vshrl.u32 %v1012, 7
        %v1014 = vsub.s32 %v744, %v1013
        %v1015 = vrot.slane %v560, %v1014
        %v1016 = vlaneseq
        %v1017 = vshrl.u32 %v1016, 7
        %v1018 = vsub.s32 %v749, %v1017
        %v1019 = vrot.slane %v563, %v1018
        %v1020 = vsel %vm754, %v1019, %v1015
        %v1021 = vlaneseq
        %v1022 = vshrl.u32 %v1021, 7
        %v1023 = vsub.s32 %v744, %v1022
        %v1024 = vrot.slane %v566, %v1023
        %v1025 = vlaneseq
        %v1026 = vshrl.u32 %v1025, 7
        %v1027 = vsub.s32 %v749, %v1026
        %v1028 = vrot.slane %v569, %v1027
        %v1029 = vsel %vm754, %v1028, %v1024
        %v1030 = vlaneseq
        %v1031 = vshrl.u32 %v1030, 7
        %v1032 = vsub.s32 %v744, %v1031
        %v1033 = vrot.slane %v572, %v1032
        %v1034 = vlaneseq
        %v1035 = vshrl.u32 %v1034, 7
        %v1036 = vsub.s32 %v749, %v1035
        %v1037 = vrot.slane %v575, %v1036
        %v1038 = vsel %vm754, %v1037, %v1033
        %v1039 = vlaneseq
        %v1040 = vshrl.u32 %v1039, 7
        %v1041 = vsub.s32 %v744, %v1040
        %v1042 = vrot.slane %v578, %v1041
        %v1043 = vlaneseq
        %v1044 = vshrl.u32 %v1043, 7
        %v1045 = vsub.s32 %v749, %v1044
        %v1046 = vrot.slane %v581, %v1045
        %v1047 = vsel %vm754, %v1046, %v1042
        %v1048 = vsel %vm783, %v1029, %v1020
        %v1049 = vsel %vm785, %v1038, %v1048
        %v1050 = vsel %vm787, %v1047, %v1049
        %v1052 = vsel %vm789, %v717, 0
        %v1055 = vsel %vm789, %v722, 0
        %v1057 = vsel %vm796, %v1050, 0
        %1059 = vmatprep.subr.mxu0 0.0
        %1060 = vmatpush1.msra.mxu0 %v1057
        %1061 = vmatprep.subr.mxu0 0.0
        %1062 = vmatpush1.msra.mxu0 0.0
        %1063 = vmatprep.subr.mxu0 0.0
        %1064 = vmatpush1.msra.mxu0 0.0
        %1065 = vmatprep.subr.mxu0 0.0
        %1066 = vmatpush1.msra.mxu0 0.0
        %1067 = vmatprep.subr.mxu0 0.0
        %1068 = vmatpush1.msra.mxu0 0.0
        %1069 = vmatprep.subr.mxu0 0.0
        %1070 = vmatpush1.msra.mxu0 0.0
        %1071 = vmatprep.subr.mxu0 0.0
        %1072 = vmatpush1.msra.mxu0 0.0
        %1073 = vmatprep.subr.mxu0 0.0
        %1074 = vmatpush1.msra.mxu0 0.0
        %1075 = vmatprep.subr.mxu0 0.0
        %1076 = vmatpush1.msra.mxu0 0.0
        %1077 = vmatprep.subr.mxu0 0.0
        %1078 = vmatpush1.msra.mxu0 0.0
        %1079 = vmatprep.subr.mxu0 0.0
        %1080 = vmatpush1.msra.mxu0 0.0
        %1081 = vmatprep.subr.mxu0 0.0
        %1082 = vmatpush1.msra.mxu0 0.0
        %1083 = vmatprep.subr.mxu0 0.0
        %1084 = vmatpush1.msra.mxu0 0.0
        %1085 = vmatprep.subr.mxu0 0.0
        %1086 = vmatpush1.msra.mxu0 0.0
        %1087 = vmatprep.subr.mxu0 0.0
        %1088 = vmatpush1.msra.mxu0 0.0
        %1089 = vmatprep.subr.mxu0 0.0
        %1090 = vmatpush1.msra.mxu0 0.0
        %1091 = vmatprep.subr.mxu0 0.0
        %1092 = vmatpush1.msra.mxu0 0.0
        %1093 = vmatprep.subr.mxu0 0.0
        %1094 = vmatpush1.msra.mxu0 0.0
        %1095 = vmatprep.subr.mxu0 0.0
        %1096 = vmatpush1.msra.mxu0 0.0
        %1097 = vmatprep.subr.mxu0 0.0
        %1098 = vmatpush1.msra.mxu0 0.0
        %1099 = vmatprep.subr.mxu0 0.0
        %1100 = vmatpush1.msra.mxu0 0.0
        %1101 = vmatprep.subr.mxu0 0.0
        %1102 = vmatpush1.msra.mxu0 0.0
        %1103 = vmatprep.subr.mxu0 0.0
        %1104 = vmatpush1.msra.mxu0 0.0
        %1105 = vmatprep.subr.mxu0 0.0
        %1106 = vmatpush1.msra.mxu0 0.0
        %1107 = vmatprep.subr.mxu0 0.0
        %1108 = vmatpush1.msra.mxu0 0.0
        %1109 = vmatprep.subr.mxu0 0.0
        %1110 = vmatpush1.msra.mxu0 0.0
        %1111 = vmatprep.subr.mxu0 0.0
        %1112 = vmatpush1.msra.mxu0 0.0
        %1113 = vmatprep.subr.mxu0 0.0
        %1114 = vmatpush1.msra.mxu0 0.0
        %1115 = vmatprep.subr.mxu0 0.0
        %1116 = vmatpush1.msra.mxu0 0.0
        %1117 = vmatprep.subr.mxu0 0.0
        %1118 = vmatpush1.msra.mxu0 0.0
        %1119 = vmatprep.subr.mxu0 0.0
        %1120 = vmatpush1.msra.mxu0 0.0
        %1121 = vmatprep.subr.mxu0 0.0
        %1122 = vmatpush1.msra.mxu0 0.0
        %1123 = vmatprep.mubr.f32.mxu0 0.0
        %1124 = vmatmul.mubr.f32.gmra.mrb[0].mxu0 %v1052
        %v1125 = vpop.f32.mrb[0].mxu0
        %v1126 = vadd.f32 %v322, %v1125
        %v1127 = vpop.f32.mrb[0].mxu0
        %1128 = vmatprep.mubr.f32.mxu0 0.0
        %1129 = vmatmul.mubr.f32.gmra.mrb[0].mxu0 %v1055
        %v1130 = vpop.f32.mrb[0].mxu0
        %v1131 = vadd.f32 %v323, %v1130
        %v1132 = vpop.f32.mrb[0].mxu0
        %1133 = vdwg.mxu0
        %v1142 = vlaneseq
        %v1143 = vshrl.u32 %v1142, 7
        %v1144 = vsub.s32 %v744, %v1143
        %v1145 = vrot.slane %v584, %v1144
        %v1146 = vlaneseq
        %v1147 = vshrl.u32 %v1146, 7
        %v1148 = vsub.s32 %v749, %v1147
        %v1149 = vrot.slane %v587, %v1148
        %v1150 = vsel %vm754, %v1149, %v1145
        %v1151 = vlaneseq
        %v1152 = vshrl.u32 %v1151, 7
        %v1153 = vsub.s32 %v744, %v1152
        %v1154 = vrot.slane %v590, %v1153
        %v1155 = vlaneseq
        %v1156 = vshrl.u32 %v1155, 7
        %v1157 = vsub.s32 %v749, %v1156
        %v1158 = vrot.slane %v593, %v1157
        %v1159 = vsel %vm754, %v1158, %v1154
        %v1160 = vlaneseq
        %v1161 = vshrl.u32 %v1160, 7
        %v1162 = vsub.s32 %v744, %v1161
        %v1163 = vrot.slane %v596, %v1162
        %v1164 = vlaneseq
        %v1165 = vshrl.u32 %v1164, 7
        %v1166 = vsub.s32 %v749, %v1165
        %v1167 = vrot.slane %v599, %v1166
        %v1168 = vsel %vm754, %v1167, %v1163
        %v1169 = vlaneseq
        %v1170 = vshrl.u32 %v1169, 7
        %v1171 = vsub.s32 %v744, %v1170
        %v1172 = vrot.slane %v602, %v1171
        %v1173 = vlaneseq
        %v1174 = vshrl.u32 %v1173, 7
        %v1175 = vsub.s32 %v749, %v1174
        %v1176 = vrot.slane %v605, %v1175
        %v1177 = vsel %vm754, %v1176, %v1172
        %v1178 = vsel %vm783, %v1159, %v1150
        %v1179 = vsel %vm785, %v1168, %v1178
        %v1180 = vsel %vm787, %v1177, %v1179
        %v1182 = vsel %vm789, %v727, 0
        %v1185 = vsel %vm789, %v732, 0
        %v1187 = vsel %vm796, %v1180, 0
        %1189 = vmatprep.subr.mxu0 0.0
        %1190 = vmatpush1.msra.mxu0 %v1187
        %1191 = vmatprep.subr.mxu0 0.0
        %1192 = vmatpush1.msra.mxu0 0.0
        %1193 = vmatprep.subr.mxu0 0.0
        %1194 = vmatpush1.msra.mxu0 0.0
        %1195 = vmatprep.subr.mxu0 0.0
        %1196 = vmatpush1.msra.mxu0 0.0
        %1197 = vmatprep.subr.mxu0 0.0
        %1198 = vmatpush1.msra.mxu0 0.0
        %1199 = vmatprep.subr.mxu0 0.0
        %1200 = vmatpush1.msra.mxu0 0.0
        %1201 = vmatprep.subr.mxu0 0.0
        %1202 = vmatpush1.msra.mxu0 0.0
        %1203 = vmatprep.subr.mxu0 0.0
        %1204 = vmatpush1.msra.mxu0 0.0
        %1205 = vmatprep.subr.mxu0 0.0
        %1206 = vmatpush1.msra.mxu0 0.0
        %1207 = vmatprep.subr.mxu0 0.0
        %1208 = vmatpush1.msra.mxu0 0.0
        %1209 = vmatprep.subr.mxu0 0.0
        %1210 = vmatpush1.msra.mxu0 0.0
        %1211 = vmatprep.subr.mxu0 0.0
        %1212 = vmatpush1.msra.mxu0 0.0
        %1213 = vmatprep.subr.mxu0 0.0
        %1214 = vmatpush1.msra.mxu0 0.0
        %1215 = vmatprep.subr.mxu0 0.0
        %1216 = vmatpush1.msra.mxu0 0.0
        %1217 = vmatprep.subr.mxu0 0.0
        %1218 = vmatpush1.msra.mxu0 0.0
        %1219 = vmatprep.subr.mxu0 0.0
        %1220 = vmatpush1.msra.mxu0 0.0
        %1221 = vmatprep.subr.mxu0 0.0
        %1222 = vmatpush1.msra.mxu0 0.0
        %1223 = vmatprep.subr.mxu0 0.0
        %1224 = vmatpush1.msra.mxu0 0.0
        %1225 = vmatprep.subr.mxu0 0.0
        %1226 = vmatpush1.msra.mxu0 0.0
        %1227 = vmatprep.subr.mxu0 0.0
        %1228 = vmatpush1.msra.mxu0 0.0
        %1229 = vmatprep.subr.mxu0 0.0
        %1230 = vmatpush1.msra.mxu0 0.0
        %1231 = vmatprep.subr.mxu0 0.0
        %1232 = vmatpush1.msra.mxu0 0.0
        %1233 = vmatprep.subr.mxu0 0.0
        %1234 = vmatpush1.msra.mxu0 0.0
        %1235 = vmatprep.subr.mxu0 0.0
        %1236 = vmatpush1.msra.mxu0 0.0
        %1237 = vmatprep.subr.mxu0 0.0
        %1238 = vmatpush1.msra.mxu0 0.0
        %1239 = vmatprep.subr.mxu0 0.0
        %1240 = vmatpush1.msra.mxu0 0.0
        %1241 = vmatprep.subr.mxu0 0.0
        %1242 = vmatpush1.msra.mxu0 0.0
        %1243 = vmatprep.subr.mxu0 0.0
        %1244 = vmatpush1.msra.mxu0 0.0
        %1245 = vmatprep.subr.mxu0 0.0
        %1246 = vmatpush1.msra.mxu0 0.0
        %1247 = vmatprep.subr.mxu0 0.0
        %1248 = vmatpush1.msra.mxu0 0.0
        %1249 = vmatprep.subr.mxu0 0.0
        %1250 = vmatpush1.msra.mxu0 0.0
        %1251 = vmatprep.subr.mxu0 0.0
        %1252 = vmatpush1.msra.mxu0 0.0
        %1253 = vmatprep.mubr.f32.mxu0 0.0
        %1254 = vmatmul.mubr.f32.gmra.mrb[0].mxu0 %v1182
        %v1255 = vpop.f32.mrb[0].mxu0
        %v1256 = vadd.f32 %v322, %v1255
        %v1257 = vpop.f32.mrb[0].mxu0
        %1258 = vmatprep.mubr.f32.mxu0 0.0
        %1259 = vmatmul.mubr.f32.gmra.mrb[0].mxu0 %v1185
        %v1260 = vpop.f32.mrb[0].mxu0
        %v1261 = vadd.f32 %v323, %v1260
        %v1262 = vpop.f32.mrb[0].mxu0
        %1263 = vdwg.mxu0
        %v1264 = vsub.f32 0.0, %v866
        %v1265 = vsub.f32 0.0, %v871
        %v1266 = vsub.f32 0.0, %v996
        %v1267 = vsub.f32 0.0, %v1001
        %v1268 = vsub.f32 0.0, %v1126
        %v1269 = vsub.f32 0.0, %v1131
        %v1270 = vsub.f32 0.0, %v1256
        %v1271 = vsub.f32 0.0, %v1261
        %v1272 = vmul.f32 %v1264, 1.442695
        %v1273 = vpow.pop %v1272
        %v1274 = vmul.f32 %v1265, 1.442695
        %v1275 = vpow.pop %v1274
        %v1276 = vmul.f32 %v1266, 1.442695
        %v1277 = vpow.pop %v1276
        %v1278 = vmul.f32 %v1267, 1.442695
        %v1279 = vpow.pop %v1278
        %v1280 = vmul.f32 %v1268, 1.442695
        %v1281 = vpow.pop %v1280
        %v1282 = vmul.f32 %v1269, 1.442695
        %v1283 = vpow.pop %v1282
        %v1284 = vmul.f32 %v1270, 1.442695
        %v1285 = vpow.pop %v1284
        %v1286 = vmul.f32 %v1271, 1.442695
        %v1287 = vpow.pop %v1286
        %v1288 = vadd.f32 %v1273, 1.0
        %v1289 = vadd.f32 %v1275, 1.0
        %v1290 = vadd.f32 %v1277, 1.0
        %v1291 = vadd.f32 %v1279, 1.0
        %v1292 = vadd.f32 %v1281, 1.0
        %v1293 = vadd.f32 %v1283, 1.0
        %v1294 = vadd.f32 %v1285, 1.0
        %v1295 = vadd.f32 %v1287, 1.0
        %v1296 = vrcp.pop %v1288
        %v1297 = vrcp.pop %v1289
        %v1298 = vrcp.pop %v1290
        %v1299 = vrcp.pop %v1291
        %v1300 = vrcp.pop %v1292
        %v1301 = vrcp.pop %v1293
        %v1302 = vrcp.pop %v1294
        %v1303 = vrcp.pop %v1295
        %v1305 = vsel %vm415, %v324, 0
        %v1308 = vsel %vm415, %v325, 0
        %1310 = vmatprep.subr.mxu0 0.0
        %1311 = vmatpush1.msra.mxu0 %v1296
        %1312 = vmatprep.subr.mxu0 0.0
        %1313 = vmatpush1.msra.mxu0 %v1297
        %1314 = vmatprep.subr.mxu0 0.0
        %1315 = vmatpush1.msra.mxu0 0.0
        %1316 = vmatprep.subr.mxu0 0.0
        %1317 = vmatpush1.msra.mxu0 0.0
        %1318 = vmatprep.subr.mxu0 0.0
        %1319 = vmatpush1.msra.mxu0 0.0
        %1320 = vmatprep.subr.mxu0 0.0
        %1321 = vmatpush1.msra.mxu0 0.0
        %1322 = vmatprep.subr.mxu0 0.0
        %1323 = vmatpush1.msra.mxu0 0.0
        %1324 = vmatprep.subr.mxu0 0.0
        %1325 = vmatpush1.msra.mxu0 0.0
        %1326 = vmatprep.subr.mxu0 0.0
        %1327 = vmatpush1.msra.mxu0 0.0
        %1328 = vmatprep.subr.mxu0 0.0
        %1329 = vmatpush1.msra.mxu0 0.0
        %1330 = vmatprep.subr.mxu0 0.0
        %1331 = vmatpush1.msra.mxu0 0.0
        %1332 = vmatprep.subr.mxu0 0.0
        %1333 = vmatpush1.msra.mxu0 0.0
        %1334 = vmatprep.subr.mxu0 0.0
        %1335 = vmatpush1.msra.mxu0 0.0
        %1336 = vmatprep.subr.mxu0 0.0
        %1337 = vmatpush1.msra.mxu0 0.0
        %1338 = vmatprep.subr.mxu0 0.0
        %1339 = vmatpush1.msra.mxu0 0.0
        %1340 = vmatprep.subr.mxu0 0.0
        %1341 = vmatpush1.msra.mxu0 0.0
        %1342 = vmatprep.subr.mxu0 0.0
        %1343 = vmatpush1.msra.mxu0 0.0
        %1344 = vmatprep.subr.mxu0 0.0
        %1345 = vmatpush1.msra.mxu0 0.0
        %1346 = vmatprep.subr.mxu0 0.0
        %1347 = vmatpush1.msra.mxu0 0.0
        %1348 = vmatprep.subr.mxu0 0.0
        %1349 = vmatpush1.msra.mxu0 0.0
        %1350 = vmatprep.subr.mxu0 0.0
        %1351 = vmatpush1.msra.mxu0 0.0
        %1352 = vmatprep.subr.mxu0 0.0
        %1353 = vmatpush1.msra.mxu0 0.0
        %1354 = vmatprep.subr.mxu0 0.0
        %1355 = vmatpush1.msra.mxu0 0.0
        %1356 = vmatprep.subr.mxu0 0.0
        %1357 = vmatpush1.msra.mxu0 0.0
        %1358 = vmatprep.subr.mxu0 0.0
        %1359 = vmatpush1.msra.mxu0 0.0
        %1360 = vmatprep.subr.mxu0 0.0
        %1361 = vmatpush1.msra.mxu0 0.0
        %1362 = vmatprep.subr.mxu0 0.0
        %1363 = vmatpush1.msra.mxu0 0.0
        %1364 = vmatprep.subr.mxu0 0.0
        %1365 = vmatpush1.msra.mxu0 0.0
        %1366 = vmatprep.subr.mxu0 0.0
        %1367 = vmatpush1.msra.mxu0 0.0
        %1368 = vmatprep.subr.mxu0 0.0
        %1369 = vmatpush1.msra.mxu0 0.0
        %1370 = vmatprep.subr.mxu0 0.0
        %1371 = vmatpush1.msra.mxu0 0.0
        %1372 = vmatprep.subr.mxu0 0.0
        %1373 = vmatpush1.msra.mxu0 0.0
        %1374 = vmatprep.mubr.f32.mxu0 0.0
        %1375 = vmatmul.mubr.f32.gmra.mrb[0].mxu0 %v1305
        %v1376 = vpop.f32.mrb[0].mxu0
        %v1377 = vadd.f32 0.0, %v1376
        %v1378 = vpop.f32.mrb[0].mxu0
        %1379 = vmatprep.mubr.f32.mxu0 0.0
        %1380 = vmatmul.mubr.f32.gmra.mrb[0].mxu0 %v1308
        %v1381 = vpop.f32.mrb[0].mxu0
        %v1382 = vadd.f32 0.0, %v1381
        %v1383 = vpop.f32.mrb[0].mxu0
        %1384 = vdwg.mxu0
        %1385 = vmatprep.subr.mxu0 0.0
        %1386 = vmatpush1.msra.mxu0 %v1298
        %1387 = vmatprep.subr.mxu0 0.0
        %1388 = vmatpush1.msra.mxu0 %v1299
        %1389 = vmatprep.subr.mxu0 0.0
        %1390 = vmatpush1.msra.mxu0 0.0
        %1391 = vmatprep.subr.mxu0 0.0
        %1392 = vmatpush1.msra.mxu0 0.0
        %1393 = vmatprep.subr.mxu0 0.0
        %1394 = vmatpush1.msra.mxu0 0.0
        %1395 = vmatprep.subr.mxu0 0.0
        %1396 = vmatpush1.msra.mxu0 0.0
        %1397 = vmatprep.subr.mxu0 0.0
        %1398 = vmatpush1.msra.mxu0 0.0
        %1399 = vmatprep.subr.mxu0 0.0
        %1400 = vmatpush1.msra.mxu0 0.0
        %1401 = vmatprep.subr.mxu0 0.0
        %1402 = vmatpush1.msra.mxu0 0.0
        %1403 = vmatprep.subr.mxu0 0.0
        %1404 = vmatpush1.msra.mxu0 0.0
        %1405 = vmatprep.subr.mxu0 0.0
        %1406 = vmatpush1.msra.mxu0 0.0
        %1407 = vmatprep.subr.mxu0 0.0
        %1408 = vmatpush1.msra.mxu0 0.0
        %1409 = vmatprep.subr.mxu0 0.0
        %1410 = vmatpush1.msra.mxu0 0.0
        %1411 = vmatprep.subr.mxu0 0.0
        %1412 = vmatpush1.msra.mxu0 0.0
        %1413 = vmatprep.subr.mxu0 0.0
        %1414 = vmatpush1.msra.mxu0 0.0
        %1415 = vmatprep.subr.mxu0 0.0
        %1416 = vmatpush1.msra.mxu0 0.0
        %1417 = vmatprep.subr.mxu0 0.0
        %1418 = vmatpush1.msra.mxu0 0.0
        %1419 = vmatprep.subr.mxu0 0.0
        %1420 = vmatpush1.msra.mxu0 0.0
        %1421 = vmatprep.subr.mxu0 0.0
        %1422 = vmatpush1.msra.mxu0 0.0
        %1423 = vmatprep.subr.mxu0 0.0
        %1424 = vmatpush1.msra.mxu0 0.0
        %1425 = vmatprep.subr.mxu0 0.0
        %1426 = vmatpush1.msra.mxu0 0.0
        %1427 = vmatprep.subr.mxu0 0.0
        %1428 = vmatpush1.msra.mxu0 0.0
        %1429 = vmatprep.subr.mxu0 0.0
        %1430 = vmatpush1.msra.mxu0 0.0
        %1431 = vmatprep.subr.mxu0 0.0
        %1432 = vmatpush1.msra.mxu0 0.0
        %1433 = vmatprep.subr.mxu0 0.0
        %1434 = vmatpush1.msra.mxu0 0.0
        %1435 = vmatprep.subr.mxu0 0.0
        %1436 = vmatpush1.msra.mxu0 0.0
        %1437 = vmatprep.subr.mxu0 0.0
        %1438 = vmatpush1.msra.mxu0 0.0
        %1439 = vmatprep.subr.mxu0 0.0
        %1440 = vmatpush1.msra.mxu0 0.0
        %1441 = vmatprep.subr.mxu0 0.0
        %1442 = vmatpush1.msra.mxu0 0.0
        %1443 = vmatprep.subr.mxu0 0.0
        %1444 = vmatpush1.msra.mxu0 0.0
        %1445 = vmatprep.subr.mxu0 0.0
        %1446 = vmatpush1.msra.mxu0 0.0
        %1447 = vmatprep.subr.mxu0 0.0
        %1448 = vmatpush1.msra.mxu0 0.0
        %1449 = vmatprep.mubr.f32.mxu0 0.0
        %1450 = vmatmul.mubr.f32.gmra.mrb[0].mxu0 %v1305
        %v1451 = vpop.f32.mrb[0].mxu0
        %v1452 = vadd.f32 0.0, %v1451
        %v1453 = vpop.f32.mrb[0].mxu0
        %1454 = vmatprep.mubr.f32.mxu0 0.0
        %1455 = vmatmul.mubr.f32.gmra.mrb[0].mxu0 %v1308
        %v1456 = vpop.f32.mrb[0].mxu0
        %v1457 = vadd.f32 0.0, %v1456
        %v1458 = vpop.f32.mrb[0].mxu0
        %1459 = vdwg.mxu0
        %1460 = vmatprep.subr.mxu0 0.0
        %1461 = vmatpush1.msra.mxu0 %v1300
        %1462 = vmatprep.subr.mxu0 0.0
        %1463 = vmatpush1.msra.mxu0 %v1301
        %1464 = vmatprep.subr.mxu0 0.0
        %1465 = vmatpush1.msra.mxu0 0.0
        %1466 = vmatprep.subr.mxu0 0.0
        %1467 = vmatpush1.msra.mxu0 0.0
        %1468 = vmatprep.subr.mxu0 0.0
        %1469 = vmatpush1.msra.mxu0 0.0
        %1470 = vmatprep.subr.mxu0 0.0
        %1471 = vmatpush1.msra.mxu0 0.0
        %1472 = vmatprep.subr.mxu0 0.0
        %1473 = vmatpush1.msra.mxu0 0.0
        %1474 = vmatprep.subr.mxu0 0.0
        %1475 = vmatpush1.msra.mxu0 0.0
        %1476 = vmatprep.subr.mxu0 0.0
        %1477 = vmatpush1.msra.mxu0 0.0
        %1478 = vmatprep.subr.mxu0 0.0
        %1479 = vmatpush1.msra.mxu0 0.0
        %1480 = vmatprep.subr.mxu0 0.0
        %1481 = vmatpush1.msra.mxu0 0.0
        %1482 = vmatprep.subr.mxu0 0.0
        %1483 = vmatpush1.msra.mxu0 0.0
        %1484 = vmatprep.subr.mxu0 0.0
        %1485 = vmatpush1.msra.mxu0 0.0
        %1486 = vmatprep.subr.mxu0 0.0
        %1487 = vmatpush1.msra.mxu0 0.0
        %1488 = vmatprep.subr.mxu0 0.0
        %1489 = vmatpush1.msra.mxu0 0.0
        %1490 = vmatprep.subr.mxu0 0.0
        %1491 = vmatpush1.msra.mxu0 0.0
        %1492 = vmatprep.subr.mxu0 0.0
        %1493 = vmatpush1.msra.mxu0 0.0
        %1494 = vmatprep.subr.mxu0 0.0
        %1495 = vmatpush1.msra.mxu0 0.0
        %1496 = vmatprep.subr.mxu0 0.0
        %1497 = vmatpush1.msra.mxu0 0.0
        %1498 = vmatprep.subr.mxu0 0.0
        %1499 = vmatpush1.msra.mxu0 0.0
        %1500 = vmatprep.subr.mxu0 0.0
        %1501 = vmatpush1.msra.mxu0 0.0
        %1502 = vmatprep.subr.mxu0 0.0
        %1503 = vmatpush1.msra.mxu0 0.0
        %1504 = vmatprep.subr.mxu0 0.0
        %1505 = vmatpush1.msra.mxu0 0.0
        %1506 = vmatprep.subr.mxu0 0.0
        %1507 = vmatpush1.msra.mxu0 0.0
        %1508 = vmatprep.subr.mxu0 0.0
        %1509 = vmatpush1.msra.mxu0 0.0
        %1510 = vmatprep.subr.mxu0 0.0
        %1511 = vmatpush1.msra.mxu0 0.0
        %1512 = vmatprep.subr.mxu0 0.0
        %1513 = vmatpush1.msra.mxu0 0.0
        %1514 = vmatprep.subr.mxu0 0.0
        %1515 = vmatpush1.msra.mxu0 0.0
        %1516 = vmatprep.subr.mxu0 0.0
        %1517 = vmatpush1.msra.mxu0 0.0
        %1518 = vmatprep.subr.mxu0 0.0
        %1519 = vmatpush1.msra.mxu0 0.0
        %1520 = vmatprep.subr.mxu0 0.0
        %1521 = vmatpush1.msra.mxu0 0.0
        %1522 = vmatprep.subr.mxu0 0.0
        %1523 = vmatpush1.msra.mxu0 0.0
        %1524 = vmatprep.mubr.f32.mxu0 0.0
        %1525 = vmatmul.mubr.f32.gmra.mrb[0].mxu0 %v1305
        %v1526 = vpop.f32.mrb[0].mxu0
        %v1527 = vadd.f32 0.0, %v1526
        %v1528 = vpop.f32.mrb[0].mxu0
        %1529 = vmatprep.mubr.f32.mxu0 0.0
        %1530 = vmatmul.mubr.f32.gmra.mrb[0].mxu0 %v1308
        %v1531 = vpop.f32.mrb[0].mxu0
        %v1532 = vadd.f32 0.0, %v1531
        %v1533 = vpop.f32.mrb[0].mxu0
        %1534 = vdwg.mxu0
        %1535 = vmatprep.subr.mxu0 0.0
        %1536 = vmatpush1.msra.mxu0 %v1302
        %1537 = vmatprep.subr.mxu0 0.0
        %1538 = vmatpush1.msra.mxu0 %v1303
        %1539 = vmatprep.subr.mxu0 0.0
        %1540 = vmatpush1.msra.mxu0 0.0
        %1541 = vmatprep.subr.mxu0 0.0
        %1542 = vmatpush1.msra.mxu0 0.0
        %1543 = vmatprep.subr.mxu0 0.0
        %1544 = vmatpush1.msra.mxu0 0.0
        %1545 = vmatprep.subr.mxu0 0.0
        %1546 = vmatpush1.msra.mxu0 0.0
        %1547 = vmatprep.subr.mxu0 0.0
        %1548 = vmatpush1.msra.mxu0 0.0
        %1549 = vmatprep.subr.mxu0 0.0
        %1550 = vmatpush1.msra.mxu0 0.0
        %1551 = vmatprep.subr.mxu0 0.0
        %1552 = vmatpush1.msra.mxu0 0.0
        %1553 = vmatprep.subr.mxu0 0.0
        %1554 = vmatpush1.msra.mxu0 0.0
        %1555 = vmatprep.subr.mxu0 0.0
        %1556 = vmatpush1.msra.mxu0 0.0
        %1557 = vmatprep.subr.mxu0 0.0
        %1558 = vmatpush1.msra.mxu0 0.0
        %1559 = vmatprep.subr.mxu0 0.0
        %1560 = vmatpush1.msra.mxu0 0.0
        %1561 = vmatprep.subr.mxu0 0.0
        %1562 = vmatpush1.msra.mxu0 0.0
        %1563 = vmatprep.subr.mxu0 0.0
        %1564 = vmatpush1.msra.mxu0 0.0
        %1565 = vmatprep.subr.mxu0 0.0
        %1566 = vmatpush1.msra.mxu0 0.0
        %1567 = vmatprep.subr.mxu0 0.0
        %1568 = vmatpush1.msra.mxu0 0.0
        %1569 = vmatprep.subr.mxu0 0.0
        %1570 = vmatpush1.msra.mxu0 0.0
        %1571 = vmatprep.subr.mxu0 0.0
        %1572 = vmatpush1.msra.mxu0 0.0
        %1573 = vmatprep.subr.mxu0 0.0
        %1574 = vmatpush1.msra.mxu0 0.0
        %1575 = vmatprep.subr.mxu0 0.0
        %1576 = vmatpush1.msra.mxu0 0.0
        %1577 = vmatprep.subr.mxu0 0.0
        %1578 = vmatpush1.msra.mxu0 0.0
        %1579 = vmatprep.subr.mxu0 0.0
        %1580 = vmatpush1.msra.mxu0 0.0
        %1581 = vmatprep.subr.mxu0 0.0
        %1582 = vmatpush1.msra.mxu0 0.0
        %1583 = vmatprep.subr.mxu0 0.0
        %1584 = vmatpush1.msra.mxu0 0.0
        %1585 = vmatprep.subr.mxu0 0.0
        %1586 = vmatpush1.msra.mxu0 0.0
        %1587 = vmatprep.subr.mxu0 0.0
        %1588 = vmatpush1.msra.mxu0 0.0
        %1589 = vmatprep.subr.mxu0 0.0
        %1590 = vmatpush1.msra.mxu0 0.0
        %1591 = vmatprep.subr.mxu0 0.0
        %1592 = vmatpush1.msra.mxu0 0.0
        %1593 = vmatprep.subr.mxu0 0.0
        %1594 = vmatpush1.msra.mxu0 0.0
        %1595 = vmatprep.subr.mxu0 0.0
        %1596 = vmatpush1.msra.mxu0 0.0
        %1597 = vmatprep.subr.mxu0 0.0
        %1598 = vmatpush1.msra.mxu0 0.0
        %1599 = vmatprep.mubr.f32.mxu0 0.0
        %1600 = vmatmul.mubr.f32.gmra.mrb[0].mxu0 %v1305
        %v1601 = vpop.f32.mrb[0].mxu0
        %v1602 = vadd.f32 0.0, %v1601
        %v1603 = vpop.f32.mrb[0].mxu0
        %1604 = vmatprep.mubr.f32.mxu0 0.0
        %1605 = vmatmul.mubr.f32.gmra.mrb[0].mxu0 %v1308
        %v1606 = vpop.f32.mrb[0].mxu0
        %v1607 = vadd.f32 0.0, %v1606
        %v1608 = vpop.f32.mrb[0].mxu0
        %1609 = vdwg.mxu0
        %v1610 = vsel %vm415, %v1377, -inf
        %v1611 = vsel %vm415, %v1382, -inf
        %v1612 = vmax.f32 %v1610, %v1611
        %v1613 = vrot.slane %v1612, 4
        %v1614 = vmax.f32 %v1612, %v1613
        %v1615 = vrot.slane %v1614, 2
        %v1616 = vmax.f32 %v1614, %v1615
        %v1617 = vrot.slane %v1616, 1
        %v1618 = vmax.f32 %v1616, %v1617
        %v1619 = vsel %vm415, %v1452, -inf
        %v1620 = vsel %vm415, %v1457, -inf
        %v1621 = vmax.f32 %v1619, %v1620
        %v1622 = vrot.slane %v1621, 4
        %v1623 = vmax.f32 %v1621, %v1622
        %v1624 = vrot.slane %v1623, 2
        %v1625 = vmax.f32 %v1623, %v1624
        %v1626 = vrot.slane %v1625, 1
        %v1627 = vmax.f32 %v1625, %v1626
        %v1628 = vsel %vm415, %v1527, -inf
        %v1629 = vsel %vm415, %v1532, -inf
        %v1630 = vmax.f32 %v1628, %v1629
        %v1631 = vrot.slane %v1630, 4
        %v1632 = vmax.f32 %v1630, %v1631
        %v1633 = vrot.slane %v1632, 2
        %v1634 = vmax.f32 %v1632, %v1633
        %v1635 = vrot.slane %v1634, 1
        %v1636 = vmax.f32 %v1634, %v1635
        %v1637 = vsel %vm415, %v1602, -inf
        %v1638 = vsel %vm415, %v1607, -inf
        %v1639 = vmax.f32 %v1637, %v1638
        %v1640 = vrot.slane %v1639, 4
        %v1641 = vmax.f32 %v1639, %v1640
        %v1642 = vrot.slane %v1641, 2
        %v1643 = vmax.f32 %v1641, %v1642
        %v1644 = vrot.slane %v1643, 1
        %v1645 = vmax.f32 %v1643, %v1644
        %v1646 = vsub.f32 %v1377, %v1618
        %v1647 = vsub.f32 %v1382, %v1618
        %v1648 = vsub.f32 %v1452, %v1627
        %v1649 = vsub.f32 %v1457, %v1627
        %v1650 = vsub.f32 %v1527, %v1636
        %v1651 = vsub.f32 %v1532, %v1636
        %v1652 = vsub.f32 %v1602, %v1645
        %v1653 = vsub.f32 %v1607, %v1645
        %v1654 = vsel %vm415, %v1646, -inf
        %1655 = vmax.xlane.f32.xlu0 %v1654
        %v1656 = vpop.xlane.xlu0 %1655
        %v1657 = vsel %vm415, %v1647, -inf
        %1658 = vmax.xlane.f32.xlu0 %v1657
        %v1659 = vpop.xlane.xlu0 %1658
        %v1660 = vsel %vm415, %v1648, -inf
        %1661 = vmax.xlane.f32.xlu0 %v1660
        %v1662 = vpop.xlane.xlu0 %1661
        %v1663 = vsel %vm415, %v1649, -inf
        %1664 = vmax.xlane.f32.xlu0 %v1663
        %v1665 = vpop.xlane.xlu0 %1664
        %v1666 = vsel %vm415, %v1650, -inf
        %1667 = vmax.xlane.f32.xlu0 %v1666
        %v1668 = vpop.xlane.xlu0 %1667
        %v1669 = vsel %vm415, %v1651, -inf
        %1670 = vmax.xlane.f32.xlu0 %v1669
        %v1671 = vpop.xlane.xlu0 %1670
        %v1672 = vsel %vm415, %v1652, -inf
        %1673 = vmax.xlane.f32.xlu0 %v1672
        %v1674 = vpop.xlane.xlu0 %1673
        %v1675 = vsel %vm415, %v1653, -inf
        %1676 = vmax.xlane.f32.xlu0 %v1675
        %v1677 = vpop.xlane.xlu0 %1676
        %v1678 = vsub.f32 %v1646, %v1656
        %v1679 = vsub.f32 %v1647, %v1659
        %v1680 = vsub.f32 %v1648, %v1662
        %v1681 = vsub.f32 %v1649, %v1665
        %v1682 = vsub.f32 %v1650, %v1668
        %v1683 = vsub.f32 %v1651, %v1671
        %v1684 = vsub.f32 %v1652, %v1674
        %v1685 = vsub.f32 %v1653, %v1677
        %v1686 = vmul.f32 %v1678, 1.442695
        %v1687 = vpow.pop %v1686
        %v1688 = vmul.f32 %v1679, 1.442695
        %v1689 = vpow.pop %v1688
        %v1690 = vmul.f32 %v1680, 1.442695
        %v1691 = vpow.pop %v1690
        %v1692 = vmul.f32 %v1681, 1.442695
        %v1693 = vpow.pop %v1692
        %v1694 = vmul.f32 %v1682, 1.442695
        %v1695 = vpow.pop %v1694
        %v1696 = vmul.f32 %v1683, 1.442695
        %v1697 = vpow.pop %v1696
        %v1698 = vmul.f32 %v1684, 1.442695
        %v1699 = vpow.pop %v1698
        %v1700 = vmul.f32 %v1685, 1.442695
        %v1701 = vpow.pop %v1700
        %v1702 = vsel %vm415, %v1687, 0.0
        %1703 = vadd.xlane.f32.xlu0 %v1702
        %v1704 = vpop.xlane.xlu0 %1703
        %v1705 = vsel %vm415, %v1689, 0.0
        %1706 = vadd.xlane.f32.xlu0 %v1705
        %v1707 = vpop.xlane.xlu0 %1706
        %v1708 = vsel %vm415, %v1691, 0.0
        %1709 = vadd.xlane.f32.xlu0 %v1708
        %v1710 = vpop.xlane.xlu0 %1709
        %v1711 = vsel %vm415, %v1693, 0.0
        %1712 = vadd.xlane.f32.xlu0 %v1711
        %v1713 = vpop.xlane.xlu0 %1712
        %v1714 = vsel %vm415, %v1695, 0.0
        %1715 = vadd.xlane.f32.xlu0 %v1714
        %v1716 = vpop.xlane.xlu0 %1715
        %v1717 = vsel %vm415, %v1697, 0.0
        %1718 = vadd.xlane.f32.xlu0 %v1717
        %v1719 = vpop.xlane.xlu0 %1718
        %v1720 = vsel %vm415, %v1699, 0.0
        %1721 = vadd.xlane.f32.xlu0 %v1720
        %v1722 = vpop.xlane.xlu0 %1721
        %v1723 = vsel %vm415, %v1701, 0.0
        %1724 = vadd.xlane.f32.xlu0 %v1723
        %v1725 = vpop.xlane.xlu0 %1724
        %v1726 = vrcp.pop %v1704
        %v1727 = vrcp.pop %v1707
        %v1728 = vrcp.pop %v1710
        %v1729 = vrcp.pop %v1713
        %v1730 = vrcp.pop %v1716
        %v1731 = vrcp.pop %v1719
        %v1732 = vrcp.pop %v1722
        %v1733 = vrcp.pop %v1725
        %v1734 = vmul.f32 %v1687, %v1726
        %v1735 = vmul.f32 %v1689, %v1727
        %v1736 = vmul.f32 %v1691, %v1728
        %v1737 = vmul.f32 %v1693, %v1729
        %v1738 = vmul.f32 %v1695, %v1730
        %v1739 = vmul.f32 %v1697, %v1731
        %v1740 = vmul.f32 %v1699, %v1732
        %v1741 = vmul.f32 %v1701, %v1733
        %1742 = vst.msk [vmem:[%s283] sm:$0xff] %vm415, %v1734
        %1743 = vst.msk [vmem:[%s283 + $0x8] sm:$0xff] %vm415, %v1735
        %1744 = vst.msk [vmem:[%s283 + $0x10] sm:$0xff] %vm415, %v1736
        %1745 = vst.msk [vmem:[%s283 + $0x18] sm:$0xff] %vm415, %v1737
        %1746 = vst.msk [vmem:[%s283 + $0x20] sm:$0xff] %vm415, %v1738
        %1747 = vst.msk [vmem:[%s283 + $0x28] sm:$0xff] %vm415, %v1739
        %1748 = vst.msk [vmem:[%s283 + $0x30] sm:$0xff] %vm415, %v1740
        %1749 = vst.msk [vmem:[%s283 + $0x38] sm:$0xff] %vm415, %v1741
        %s1750 = sand.u32 %s163, 1
        %s1751 = scalar_lea.sflag [#allocation4], %s1750
        %s1752 = sand.u32 %s163, 1
        %s1753 = smul.addr %s1752, 64
        %s1754 = scalar_lea.vmem [#allocation7], %s1753
        // Predicated region
        $region53: #{tpu_custom_call.1} parent=43 // pred_check
          %p1755 = pneg %p173
        $region54: #{tpu_custom_call.1} parent=43 // pred_check_branch
          %1757 = sbr.rel (%p1755) target = $region56
        $region55: #{tpu_custom_call.1} parent=43 // pred_region
          %s1758 = smul.u32 4, %s24
          %s1760 = ssub.s32 1024, 1024
          %1761 = vsyncadd %s1751, %s1760
          %s1762 = smul.addr %s1758, 2
          %s1763 = smul.addr %s1762, 128
          %s1764 = scalar_lea.hbm %s6, %s1763
          %s1765 = sshll.u32 %s1754, 4
          %s1766 = int_to_ptr.vmem [resolvable:$true] %s1765
          %1771 = dma.vmem_to_hbm [thread:$0]  %s1766, 1024, %s1764, %s1751, 128, 128, 8
        $region56: #{tpu_custom_call.1} parent=43 // pred_fallthru
          _
      $region44: #{tpu_custom_call.1} parent=5 // pred_fallthru
        _
      %p1772 = scmp.le.s32.totalorder 2, %s19
      // Predicated region
      $region57: #{tpu_custom_call.1} parent=5 // pred_check
        %p1773 = pneg %p1772
      $region58: #{tpu_custom_call.1} parent=5 // pred_check_branch
        %1775 = sbr.rel (%p1773) target = $region60
      $region59: #{tpu_custom_call.1} parent=5 // pred_region
        %s1776 = ssub.s32 %s19, 2
        // Predicated region
        $region61: #{tpu_custom_call.1} parent=59 // pred_check
          %p1777 = pneg %p179
        $region62: #{tpu_custom_call.1} parent=59 // pred_check_branch
          %1779 = sbr.rel (%p1777) target = $region64
        $region63: #{tpu_custom_call.1} parent=59 // pred_region
          %s1780 = sand.u32 %s164, 1
          %s1781 = scalar_lea.sflag [#allocation4], %s1780
          %s1782 = sand.u32 %s164, 1
          %s1783 = smul.addr %s1782, 64
          %s1784 = scalar_lea.vmem [#allocation7], %s1783
          %1785 = dma.done %s1781, 1024
        $region64: #{tpu_custom_call.1} parent=59 // pred_fallthru
          _
      $region60: #{tpu_custom_call.1} parent=5 // pred_fallthru
        _
    $region6: #{tpu_custom_call.1} parent=1 // loop_footer
      %s23 = sadd.s32 1, %s19
    $region7: #{tpu_custom_call.1} parent=1 // loop_footer_branch
      %18 = sbr.rel target = $region3
    $region8: #{tpu_custom_call.1} parent=1 // loop_exit
      _
    %1786 = vsyncpa [#allocation3], 1
    %s1787 = scalar_lea.sflag [#allocation3], 1
    %1788 = vsyncpa %s1787, 1
    %1789 = vsyncpa [#allocation6], 1
    %1790 = vsyncpa [#allocation4], 1
    %s1791 = scalar_lea.sflag [#allocation4], 1
    %1792 = vsyncpa %s1791, 1

</llo_original>
